<compile_context>
chip_gen: v7x
topology: tpu7x:2x2x1
jax: 0.10.0
libtpu: 0.0.40
codegen_flags: <defaults>
</compile_context>

<pallas_src>
import functools

import jax
import jax.numpy as jnp
from jax.experimental import pallas as pl
from jax.experimental.pallas import tpu as pltpu


# ---------------------------------------------------------------------------
# slab layout / packing
# ---------------------------------------------------------------------------

def _rup(n, m):
    return ((n + m - 1) // m) * m


def _slab_layouts(B, T, J, F, D, S2, N):
    """Static packing layout for the three weight slabs."""
    LD, LS, LNs, LF = J * D, J * S2, J * N, J * F
    TB = T * B
    D5 = 5 * D

    # vec slab: one (1, width) vector per row
    vec_entries = [
        ("emb_b", LD), ("ln1_g", LD), ("ln1_b", LD),
        ("bu", LS), ("bv", LS), ("ln2_g", LS), ("ln2_b", LS),
        ("gate_b", LS), ("sgu_out_b", LD),
        ("lru_ln_g", LD), ("lru_ln_b", LD), ("lru_B_b", LNs),
        ("lam", 2 * LNs), ("gam", 2 * LNs), ("lru_C_b", LD),
        ("agg2_b", D), ("reg1_b", D), ("reg2_w", D), ("reg2_b", 1),
    ]
    vec_w = _rup(max(w for _, w in vec_entries), 128)
    voff = {name: (r, w) for r, (name, w) in enumerate(vec_entries)}
    vec_shape = (_rup(len(vec_entries), 8), vec_w)

    # square slab: row-stacked matrices, all <= 128 lanes wide here
    sq_entries = [
        ("emb", LF, LD), ("m_lnD", LD, LD),
        ("wu", LD, LS), ("wv", LD, LS), ("m_lnS2", LS, LS),
        ("gate", LS, LS), ("wout", LS, LD),
        ("wB", LD, LNs), ("wCf", LNs, LD), ("wCb", LNs, LD),
        ("w2", D5, D), ("m_avg", B, TB), ("wr1", D, D),
    ]
    sq_w = _rup(max(c for _, _, c in sq_entries), 128)
    soff, row = {}, 0
    for name, nr, nc in sq_entries:
        soff[name] = (row, nr, nc)
        row += _rup(nr, 8)                      # keep 8-sublane aligned offsets
    sq_shape = (row, sq_w)

    # wide slab: the two 5*D-wide tensors of the aggregation MLP
    wide_entries = [("w1", LD, D5), ("agg1_b", 1, D5)]
    wide_w = _rup(D5, 128)
    woff, row = {}, 0
    for name, nr, nc in wide_entries:
        woff[name] = (row, nr, nc)
        row += _rup(nr, 8)
    wide_shape = (row, wide_w)

    return (vec_shape, voff), (sq_shape, soff), (wide_shape, woff)


def _pack_slabs(p, B, T, J, F, D, S2, N, layouts):
    (vec_shape, voff), (sq_shape, soff), (wide_shape, woff) = layouts
    TB = T * B
    eyeJ = jnp.eye(J, dtype=jnp.float32)

    def tileJ(v):                               # lanes ordered (j, channel)
        return jnp.tile(v.astype(jnp.float32), (J,))

    def kronJ(m):                               # block-diag kron(I_J, m)
        return jnp.kron(eyeJ, m.astype(jnp.float32))

    lam_f, lam_b = p["lru_lam_f"], p["lru_lam_b"]
    gam_f = jnp.sqrt(1.0 - lam_f ** 2)
    gam_b = jnp.sqrt(1.0 - lam_b ** 2)

    vec_vals = {
        "emb_b": tileJ(p["embed_b"]),
        "ln1_g": tileJ(p["sgu_ln1_g"]), "ln1_b": tileJ(p["sgu_ln1_b"]),
        "bu": tileJ(p["sgu_in_b"][:S2]), "bv": tileJ(p["sgu_in_b"][S2:]),
        "ln2_g": tileJ(p["sgu_ln2_g"]), "ln2_b": tileJ(p["sgu_ln2_b"]),
        "gate_b": jnp.repeat(p["sgu_sp_b"].astype(jnp.float32), S2),
        "sgu_out_b": tileJ(p["sgu_out_b"]),
        "lru_ln_g": tileJ(p["lru_ln_g"]), "lru_ln_b": tileJ(p["lru_ln_b"]),
        "lru_B_b": tileJ(p["lru_B_b"]),
        "lam": jnp.concatenate([tileJ(lam_f), tileJ(lam_b)]),
        "gam": jnp.concatenate([tileJ(gam_f), tileJ(gam_b)]),
        "lru_C_b": tileJ(p["lru_C_b"]),
        "agg2_b": p["agg2_b"], "reg1_b": p["reg1_b"],
        "reg2_w": p["reg2_w"].reshape(-1), "reg2_b": p["reg2_b"],
    }
    slab_vec = jnp.zeros(vec_shape, jnp.float32)
    for name, (r, w) in voff.items():
        slab_vec = slab_vec.at[r, :w].set(vec_vals[name])

    # temporal-mean matrix over rows in (t, b) order
    m_avg = jnp.zeros((B, TB), jnp.float32)
    for b in range(B):
        m_avg = m_avg.at[b, jnp.arange(T) * B + b].set(1.0 / T)

    sq_vals = {
        "emb": kronJ(p["embed_w"].T),
        "m_lnD": kronJ(jnp.full((D, D), 1.0 / D, jnp.float32)),
        "wu": kronJ(p["sgu_in_w"][:S2].T),
        "wv": kronJ(p["sgu_in_w"][S2:].T),
        "m_lnS2": kronJ(jnp.full((S2, S2), 1.0 / S2, jnp.float32)),
        "gate": jnp.kron(p["sgu_sp_w"].T.astype(jnp.float32),
                         jnp.eye(S2, dtype=jnp.float32)),
        "wout": kronJ(p["sgu_out_w"].T),
        "wB": kronJ(p["lru_B_w"].T),
        "wCf": kronJ(p["lru_C_w"][:, :N].T),
        "wCb": kronJ(p["lru_C_w"][:, N:].T),
        "w2": p["agg2_w"].T,
        "m_avg": m_avg,
        "wr1": p["reg1_w"].T,
    }
    slab_sq = jnp.zeros(sq_shape, jnp.float32)
    for name, (r, nr, nc) in soff.items():
        slab_sq = slab_sq.at[r:r + nr, :nc].set(sq_vals[name])

    wide_vals = {"w1": p["agg1_w"].T, "agg1_b": p["agg1_b"].reshape(1, -1)}
    slab_wide = jnp.zeros(wide_shape, jnp.float32)
    for name, (r, nr, nc) in woff.items():
        slab_wide = slab_wide.at[r:r + nr, :nc].set(wide_vals[name])

    return slab_vec, slab_sq, slab_wide


# ---------------------------------------------------------------------------
# fused forward kernel
# ---------------------------------------------------------------------------

def _g2taq_kernel(x_ref, vec_ref, sq_ref, wide_ref, o_ref, *,
                  B, T, J, N, voff, soff, woff):
    f32 = jnp.float32
    dot = functools.partial(jnp.dot, preferred_element_type=f32)
    gelu = functools.partial(jax.nn.gelu, approximate=True)
    LNs = J * N

    vall = vec_ref[...]                      # all 1-row vectors, one load

    def vec(name):
        r, w = voff[name]
        return vall[r:r + 1, :w]

    def sq(name):
        r, nr, nc = soff[name]
        return sq_ref[r:r + nr, :nc]

    def wide(name):
        r, nr, nc = woff[name]
        return wide_ref[r:r + nr, :nc]

    def seg_ln(x, m_seg, g, b, eps=1e-5):
        # per-joint LayerNorm over lane segments; segment mean/var via a
        # constant block-averaging matmul (MXU slot is otherwise idle).
        mu = dot(x, m_seg)
        xc = x - mu
        var = dot(xc * xc, m_seg)
        return xc * jax.lax.rsqrt(var + eps) * g + b

    # 1) embed: (T*B, J*F) @ kron(I_J, W_emb^T) -> rows=(t,b), lanes=(j,d)
    h0 = dot(x_ref[...], sq("emb")) + vec("emb_b")

    # 2) SGU spatial gating; joint mixing lane-side via kron(W_sp^T, I_S2)
    m_lnD = sq("m_lnD")
    xn = seg_ln(h0, m_lnD, vec("ln1_g"), vec("ln1_b"))
    u_ = gelu(dot(xn, sq("wu")) + vec("bu"))
    v_ = gelu(dot(xn, sq("wv")) + vec("bv"))
    v_ = seg_ln(v_, sq("m_lnS2"), vec("ln2_g"), vec("ln2_b"))
    g = dot(v_, sq("gate")) + vec("gate_b")
    h1 = h0 + dot(u_ * g, sq("wout")) + vec("sgu_out_b")

    # 3) bidirectional diagonal LRU over time; fwd+bwd packed into one
    #    vreg-wide elementwise update per (unrolled) step
    xn2 = seg_ln(h1, m_lnD, vec("lru_ln_g"), vec("lru_ln_b"))
    u = dot(xn2, sq("wB")) + vec("lru_B_b")                 # (T*B, J*N)
    lam = vec("lam")
    gam = vec("gam")
    h_pk = jnp.zeros((B, 2 * LNs), f32)
    hf_t = [None] * T
    hb_t = [None] * T
    for s in range(T):                                      # T static & small
        tb = T - 1 - s
        u_step = jnp.concatenate(
            [u[s * B:(s + 1) * B, :], u[tb * B:(tb + 1) * B, :]], axis=-1)
        h_pk = lam * h_pk + gam * u_step
        hf_t[s] = h_pk[:, :LNs]
        hb_t[tb] = h_pk[:, LNs:]
    hf_all = jnp.concatenate(hf_t, axis=0)                  # (T*B, J*N)
    hb_all = jnp.concatenate(hb_t, axis=0)
    h2 = (h1 + dot(hf_all, sq("wCf")) + dot(hb_all, sq("wCb"))
          + vec("lru_C_b"))

    # 4) 'B T J D -> B T (J D)': lanes are already (j, d) -> no-op.

    # 5) spatial aggregation MLP
    a = gelu(dot(h2, wide("w1")) + wide("agg1_b"))
    a = dot(a, sq("w2")) + vec("agg2_b")                    # (T*B, D)

    # 6) temporal mean per batch row (tiny matmul with the averaging matrix)
    xm = dot(sq("m_avg"), a)                                # (B, D)

    # 7) regression head; final Linear(D, 1) as a lane reduction
    r = gelu(dot(xm, sq("wr1")) + vec("reg1_b"))
    logit = jnp.sum(r * vec("reg2_w"), axis=-1, keepdims=True) + vec("reg2_b")
    o_ref[...] = jax.nn.sigmoid(logit)


def _full_spec(shape):
    nd = len(shape)
    return pl.BlockSpec(shape, lambda i, _nd=nd: (0,) * _nd)


def make_g2taq_forward(params, batch, time_steps):
    """Returns (jitted forward fn, packed weight slabs)."""
    p = params
    B, T = batch, time_steps
    D, F = p["embed_w"].shape
    J = p["sgu_sp_w"].shape[0]
    S = p["sgu_in_w"].shape[0]
    S2 = S // 2
    N = p["lru_B_w"].shape[0]

    layouts = _slab_layouts(B, T, J, F, D, S2, N)
    slabs = _pack_slabs(p, B, T, J, F, D, S2, N, layouts)
    (_, voff), (_, soff), (_, woff) = layouts

    kernel = functools.partial(_g2taq_kernel, B=B, T=T, J=J, N=N,
                               voff=voff, soff=soff, woff=woff)
    out_shape = jax.ShapeDtypeStruct((B, 1), jnp.float32)

    @jax.jit
    def forward(x, slab_vec, slab_sq, slab_wide):
        # rows ordered (t, b); lanes ordered (j, feature).
        x_rows = jnp.transpose(x, (1, 0, 2, 3)).reshape(T * B, J * F)
        inputs = (x_rows, slab_vec, slab_sq, slab_wide)
        out = pl.pallas_call(
            kernel,
            out_shape=out_shape,
            grid=(1,),
            in_specs=[_full_spec(a.shape) for a in inputs],
            out_specs=_full_spec((B, 1)),
            compiler_params=pltpu.CompilerParams(
                dimension_semantics=("arbitrary",),
                vmem_limit_bytes=32 * 1024 * 1024),
        )(*inputs)
        return out[:, 0]

    return forward, slabs


# ---------------------------------------------------------------------------
# parameters
# ---------------------------------------------------------------------------

def init_params(key, model_dim, joint_count, joint_features, temporal_dim, spatial_dim):
    D, J, F, N, S = model_dim, joint_count, joint_features, temporal_dim, spatial_dim
    S2 = S // 2
    keys = jax.random.split(key, 12)

    def lin(k, out_f, in_f):
        w = jax.random.normal(k, (out_f, in_f), jnp.float32) / jnp.sqrt(float(in_f))
        return w, jnp.zeros((out_f,), jnp.float32)

    p = {}
    p["embed_w"], p["embed_b"] = lin(keys[0], D, F)
    # SGU spatial layer (gMLP-style over the joint axis)
    p["sgu_ln1_g"], p["sgu_ln1_b"] = jnp.ones((D,), jnp.float32), jnp.zeros((D,), jnp.float32)
    p["sgu_in_w"], p["sgu_in_b"] = lin(keys[1], S, D)
    p["sgu_ln2_g"], p["sgu_ln2_b"] = jnp.ones((S2,), jnp.float32), jnp.zeros((S2,), jnp.float32)
    p["sgu_sp_w"] = 0.01 * jax.random.normal(keys[2], (J, J), jnp.float32)
    p["sgu_sp_b"] = jnp.ones((J,), jnp.float32)
    p["sgu_out_w"], p["sgu_out_b"] = lin(keys[3], D, S2)
    # LRU temporal layer (bidirectional diagonal recurrence, state dim N)
    p["lru_ln_g"], p["lru_ln_b"] = jnp.ones((D,), jnp.float32), jnp.zeros((D,), jnp.float32)
    p["lru_B_w"], p["lru_B_b"] = lin(keys[4], N, D)
    p["lru_lam_f"] = jnp.linspace(0.60, 0.95, N).astype(jnp.float32)
    p["lru_lam_b"] = jnp.linspace(0.55, 0.90, N).astype(jnp.float32)
    p["lru_C_w"], p["lru_C_b"] = lin(keys[5], D, 2 * N)
    # spatial_agg : Linear(J*D, 5D) -> GELU -> Linear(5D, D)
    p["agg1_w"], p["agg1_b"] = lin(keys[6], 5 * D, J * D)
    p["agg2_w"], p["agg2_b"] = lin(keys[7], D, 5 * D)
    # regression : Linear(D, D) -> GELU -> Linear(D, 1) -> Sigmoid
    p["reg1_w"], p["reg1_b"] = lin(keys[8], D, D)
    p["reg2_w"], p["reg2_b"] = lin(keys[9], 1, D)
    return p


# ---------------------------------------------------------------------------
# pure-JAX reference (no Pallas) for validation
# ---------------------------------------------------------------------------

_HP = jax.lax.Precision.HIGHEST
_mm = functools.partial(jnp.dot, precision=_HP)


def _ln(x, g, b, eps=1e-5):
    mu = jnp.mean(x, axis=-1, keepdims=True)
    var = jnp.mean((x - mu) ** 2, axis=-1, keepdims=True)
    return (x - mu) * jax.lax.rsqrt(var + eps) * g + b


def g2taq_reference(x, p):
    B, T, J, F = x.shape
    D = p["embed_w"].shape[0]
    h = _mm(x.reshape(-1, F), p["embed_w"].T) + p["embed_b"]           # (BTJ, D)
    # SGU
    xn = _ln(h, p["sgu_ln1_g"], p["sgu_ln1_b"])
    y = jax.nn.gelu(_mm(xn, p["sgu_in_w"].T) + p["sgu_in_b"], approximate=True)
    S2 = y.shape[-1] // 2
    u_, v_ = y[:, :S2], y[:, S2:]
    v_ = _ln(v_, p["sgu_ln2_g"], p["sgu_ln2_b"])
    u3 = u_.reshape(B * T, J, S2)
    v3 = v_.reshape(B * T, J, S2)
    g = jnp.einsum("mks,jk->mjs", v3, p["sgu_sp_w"], precision=_HP)
    g = g + p["sgu_sp_b"][None, :, None]
    gated = (u3 * g).reshape(-1, S2)
    h = h + _mm(gated, p["sgu_out_w"].T) + p["sgu_out_b"]
    h = h.reshape(B, T, J, D)
    # LRU over time
    xseq = jnp.transpose(h, (0, 2, 1, 3)).reshape(B * J, T, D)
    xn2 = _ln(xseq.reshape(-1, D), p["lru_ln_g"], p["lru_ln_b"])
    N = p["lru_B_w"].shape[0]
    u = (_mm(xn2, p["lru_B_w"].T) + p["lru_B_b"]).reshape(B * J, T, N)
    lam_f, lam_b = p["lru_lam_f"], p["lru_lam_b"]
    gam_f = jnp.sqrt(1.0 - lam_f ** 2)
    gam_b = jnp.sqrt(1.0 - lam_b ** 2)

    def scan_dir(useq, lam, gam):
        hst = jnp.zeros((useq.shape[0], useq.shape[2]), jnp.float32)
        outs = []
        for t in range(useq.shape[1]):
            hst = lam * hst + gam * useq[:, t]
            outs.append(hst)
        return jnp.stack(outs, axis=1)

    hf = scan_dir(u, lam_f, gam_f)
    hb = jnp.flip(scan_dir(jnp.flip(u, axis=1), lam_b, gam_b), axis=1)
    hcat = jnp.concatenate([hf, hb], axis=-1)
    yC = _mm(hcat.reshape(-1, 2 * N), p["lru_C_w"].T) + p["lru_C_b"]
    hseq = xseq + yC.reshape(B * J, T, D)
    # '(B J) T D -> B T (J D)'
    h2 = jnp.transpose(hseq.reshape(B, J, T, D), (0, 2, 1, 3)).reshape(B, T, J * D)
    a = jax.nn.gelu(_mm(h2.reshape(-1, J * D), p["agg1_w"].T) + p["agg1_b"],
                    approximate=True)
    a = (_mm(a, p["agg2_w"].T) + p["agg2_b"]).reshape(B, T, D)
    xm = jnp.mean(a, axis=1)
    r = jax.nn.gelu(_mm(xm, p["reg1_w"].T) + p["reg1_b"], approximate=True)
    out = jax.nn.sigmoid(_mm(r, p["reg2_w"].T) + p["reg2_b"])
    return jnp.squeeze(out)


# ---------------------------------------------------------------------------
# main
# ---------------------------------------------------------------------------

if __name__ == "__main__":
    model_dim = 32
    joint_count = 4
    joint_features = 6
    temporal_dim = 16
    spatial_dim = 64
    B, T = 2, 8

    key = jax.random.PRNGKey(0)
    k_x, k_p = jax.random.split(key)
    x = jax.random.normal(k_x, (B, T, joint_count, joint_features), jnp.float32)
    params = init_params(k_p, model_dim, joint_count, joint_features,
                         temporal_dim, spatial_dim)

    forward, slabs = make_g2taq_forward(params, B, T)
    out = jax.block_until_ready(forward(x, *slabs))

    assert out.shape == (B,), out.shape
    assert bool(jnp.all(jnp.isfinite(out)))
    assert bool(jnp.all((out >= 0.0) & (out <= 1.0)))      # sigmoid range

    ref = jax.block_until_ready(g2taq_reference(x, params))
    assert ref.shape == (B,), ref.shape
    max_err = float(jnp.max(jnp.abs(out - ref)))
    assert max_err < 5e-3, f"kernel vs reference mismatch: {max_err}"

    print("KERNEL_OK")
</pallas_src>

<mosaic_0001>
module attributes {stable_mosaic.version = 11 : i64} {
  func.func @_g2taq_kernel(%arg0: i32, %arg1: memref<16x24xf32, #tpu.memory_space<vmem>>, %arg2: memref<24x128xf32, #tpu.memory_space<vmem>>, %arg3: memref<1248x128xf32, #tpu.memory_space<vmem>>, %arg4: memref<136x256xf32, #tpu.memory_space<vmem>>, %arg5: memref<2x1xf32, #tpu.memory_space<vmem>>) attributes {dimension_semantics = [#tpu.dimension_semantics<arbitrary>], iteration_bounds = array<i64: 1>, scalar_prefetch = 0 : i64, scratch_operands = 0 : i64, tpu.core_type = #tpu.core_type<tc>, window_params = [{pipeline_mode = #tpu.pipeline_mode<synchronous>, transform_indices = @transform_0, window_bounds = array<i64: 16, 24>}, {pipeline_mode = #tpu.pipeline_mode<synchronous>, transform_indices = @transform_1, window_bounds = array<i64: 24, 128>}, {pipeline_mode = #tpu.pipeline_mode<synchronous>, transform_indices = @transform_2, window_bounds = array<i64: 1248, 128>}, {pipeline_mode = #tpu.pipeline_mode<synchronous>, transform_indices = @transform_3, window_bounds = array<i64: 136, 256>}, {pipeline_mode = #tpu.pipeline_mode<synchronous>, transform_indices = @transform_4, window_bounds = array<i64: 2, 1>}]} {
    %c0 = arith.constant 0 : index
    %c0_0 = arith.constant 0 : index
    %0 = vector.load %arg2[%c0, %c0_0] : memref<24x128xf32, #tpu.memory_space<vmem>>, vector<24x128xf32>
    %c0_1 = arith.constant 0 : index
    %c0_2 = arith.constant 0 : index
    %1 = vector.load %arg1[%c0_1, %c0_2] : memref<16x24xf32, #tpu.memory_space<vmem>>, vector<16x24xf32>
    %c0_3 = arith.constant 0 : index
    %c0_4 = arith.constant 0 : index
    %2 = vector.load %arg3[%c0_3, %c0_4] : memref<1248x128xf32, #tpu.memory_space<vmem>>, vector<24x128xf32>
    %cst = arith.constant dense<0.000000e+00> : vector<16x128xf32>
    %3 = tpu.matmul %1, %2, %cst {dimension_numbers = #tpu.dot_dimension_numbers<[1], [0], [0], [1], [0, 0, 1, 1], [], []>} : vector<16x24xf32>, vector<24x128xf32>, vector<16x128xf32> -> vector<16x128xf32>
    %4 = vector.extract_strided_slice %0 {offsets = [0, 0], sizes = [1, 128], strides = [1, 1]} : vector<24x128xf32> to vector<1x128xf32>
    %5 = vector.broadcast %4 : vector<1x128xf32> to vector<16x128xf32>
    %6 = arith.addf %3, %5 : vector<16x128xf32>
    %c24 = arith.constant 24 : index
    %c0_5 = arith.constant 0 : index
    %7 = vector.load %arg3[%c24, %c0_5] : memref<1248x128xf32, #tpu.memory_space<vmem>>, vector<128x128xf32>
    %8 = vector.extract_strided_slice %0 {offsets = [1, 0], sizes = [1, 128], strides = [1, 1]} : vector<24x128xf32> to vector<1x128xf32>
    %9 = vector.extract_strided_slice %0 {offsets = [2, 0], sizes = [1, 128], strides = [1, 1]} : vector<24x128xf32> to vector<1x128xf32>
    %cst_6 = arith.constant dense<0.000000e+00> : vector<16x128xf32>
    %10 = tpu.matmul %6, %7, %cst_6 {dimension_numbers = #tpu.dot_dimension_numbers<[1], [0], [0], [1], [0, 0, 1, 1], [], []>} : vector<16x128xf32>, vector<128x128xf32>, vector<16x128xf32> -> vector<16x128xf32>
    %11 = arith.subf %6, %10 : vector<16x128xf32>
    %12 = arith.mulf %11, %11 : vector<16x128xf32>
    %cst_7 = arith.constant dense<0.000000e+00> : vector<16x128xf32>
    %13 = tpu.matmul %12, %7, %cst_7 {dimension_numbers = #tpu.dot_dimension_numbers<[1], [0], [0], [1], [0, 0, 1, 1], [], []>} : vector<16x128xf32>, vector<128x128xf32>, vector<16x128xf32> -> vector<16x128xf32>
    %cst_8 = arith.constant 9.99999974E-6 : f32
    %14 = vector.broadcast %cst_8 : f32 to vector<16x128xf32>
    %15 = arith.addf %13, %14 : vector<16x128xf32>
    %16 = math.rsqrt %15 : vector<16x128xf32>
    %17 = arith.mulf %11, %16 : vector<16x128xf32>
    %18 = vector.broadcast %8 : vector<1x128xf32> to vector<16x128xf32>
    %19 = arith.mulf %17, %18 : vector<16x128xf32>
    %20 = vector.broadcast %9 : vector<1x128xf32> to vector<16x128xf32>
    %21 = arith.addf %19, %20 : vector<16x128xf32>
    %c152 = arith.constant 152 : index
    %c0_9 = arith.constant 0 : index
    %22 = vector.load %arg3[%c152, %c0_9] : memref<1248x128xf32, #tpu.memory_space<vmem>>, vector<128x128xf32>
    %cst_10 = arith.constant dense<0.000000e+00> : vector<16x128xf32>
    %23 = tpu.matmul %21, %22, %cst_10 {dimension_numbers = #tpu.dot_dimension_numbers<[1], [0], [0], [1], [0, 0, 1, 1], [], []>} : vector<16x128xf32>, vector<128x128xf32>, vector<16x128xf32> -> vector<16x128xf32>
    %24 = vector.extract_strided_slice %0 {offsets = [3, 0], sizes = [1, 128], strides = [1, 1]} : vector<24x128xf32> to vector<1x128xf32>
    %25 = vector.broadcast %24 : vector<1x128xf32> to vector<16x128xf32>
    %26 = arith.addf %23, %25 : vector<16x128xf32>
    %27 = arith.mulf %26, %26 : vector<16x128xf32>
    %28 = arith.mulf %26, %27 : vector<16x128xf32>
    %cst_11 = arith.constant 4.471500e-02 : f32
    %29 = vector.broadcast %cst_11 : f32 to vector<16x128xf32>
    %30 = arith.mulf %29, %28 : vector<16x128xf32>
    %31 = arith.addf %26, %30 : vector<16x128xf32>
    %cst_12 = arith.constant 0.797884583 : f32
    %32 = vector.broadcast %cst_12 : f32 to vector<16x128xf32>
    %33 = arith.mulf %32, %31 : vector<16x128xf32>
    %34 = math.tanh %33 : vector<16x128xf32>
    %cst_13 = arith.constant 1.000000e+00 : f32
    %35 = vector.broadcast %cst_13 : f32 to vector<16x128xf32>
    %36 = arith.addf %35, %34 : vector<16x128xf32>
    %cst_14 = arith.constant 5.000000e-01 : f32
    %37 = vector.broadcast %cst_14 : f32 to vector<16x128xf32>
    %38 = arith.mulf %37, %36 : vector<16x128xf32>
    %39 = arith.mulf %26, %38 : vector<16x128xf32>
    %c280 = arith.constant 280 : index
    %c0_15 = arith.constant 0 : index
    %40 = vector.load %arg3[%c280, %c0_15] : memref<1248x128xf32, #tpu.memory_space<vmem>>, vector<128x128xf32>
    %cst_16 = arith.constant dense<0.000000e+00> : vector<16x128xf32>
    %41 = tpu.matmul %21, %40, %cst_16 {dimension_numbers = #tpu.dot_dimension_numbers<[1], [0], [0], [1], [0, 0, 1, 1], [], []>} : vector<16x128xf32>, vector<128x128xf32>, vector<16x128xf32> -> vector<16x128xf32>
    %42 = vector.extract_strided_slice %0 {offsets = [4, 0], sizes = [1, 128], strides = [1, 1]} : vector<24x128xf32> to vector<1x128xf32>
    %43 = vector.broadcast %42 : vector<1x128xf32> to vector<16x128xf32>
    %44 = arith.addf %41, %43 : vector<16x128xf32>
    %45 = arith.mulf %44, %44 : vector<16x128xf32>
    %46 = arith.mulf %44, %45 : vector<16x128xf32>
    %cst_17 = arith.constant 4.471500e-02 : f32
    %47 = vector.broadcast %cst_17 : f32 to vector<16x128xf32>
    %48 = arith.mulf %47, %46 : vector<16x128xf32>
    %49 = arith.addf %44, %48 : vector<16x128xf32>
    %cst_18 = arith.constant 0.797884583 : f32
    %50 = vector.broadcast %cst_18 : f32 to vector<16x128xf32>
    %51 = arith.mulf %50, %49 : vector<16x128xf32>
    %52 = math.tanh %51 : vector<16x128xf32>
    %cst_19 = arith.constant 1.000000e+00 : f32
    %53 = vector.broadcast %cst_19 : f32 to vector<16x128xf32>
    %54 = arith.addf %53, %52 : vector<16x128xf32>
    %cst_20 = arith.constant 5.000000e-01 : f32
    %55 = vector.broadcast %cst_20 : f32 to vector<16x128xf32>
    %56 = arith.mulf %55, %54 : vector<16x128xf32>
    %57 = arith.mulf %44, %56 : vector<16x128xf32>
    %c408 = arith.constant 408 : index
    %c0_21 = arith.constant 0 : index
    %58 = vector.load %arg3[%c408, %c0_21] : memref<1248x128xf32, #tpu.memory_space<vmem>>, vector<128x128xf32>
    %59 = vector.extract_strided_slice %0 {offsets = [5, 0], sizes = [1, 128], strides = [1, 1]} : vector<24x128xf32> to vector<1x128xf32>
    %60 = vector.extract_strided_slice %0 {offsets = [6, 0], sizes = [1, 128], strides = [1, 1]} : vector<24x128xf32> to vector<1x128xf32>
    %cst_22 = arith.constant dense<0.000000e+00> : vector<16x128xf32>
    %61 = tpu.matmul %57, %58, %cst_22 {dimension_numbers = #tpu.dot_dimension_numbers<[1], [0], [0], [1], [0, 0, 1, 1], [], []>} : vector<16x128xf32>, vector<128x128xf32>, vector<16x128xf32> -> vector<16x128xf32>
    %62 = arith.subf %57, %61 : vector<16x128xf32>
    %63 = arith.mulf %62, %62 : vector<16x128xf32>
    %cst_23 = arith.constant dense<0.000000e+00> : vector<16x128xf32>
    %64 = tpu.matmul %63, %58, %cst_23 {dimension_numbers = #tpu.dot_dimension_numbers<[1], [0], [0], [1], [0, 0, 1, 1], [], []>} : vector<16x128xf32>, vector<128x128xf32>, vector<16x128xf32> -> vector<16x128xf32>
    %cst_24 = arith.constant 9.99999974E-6 : f32
    %65 = vector.broadcast %cst_24 : f32 to vector<16x128xf32>
    %66 = arith.addf %64, %65 : vector<16x128xf32>
    %67 = math.rsqrt %66 : vector<16x128xf32>
    %68 = arith.mulf %62, %67 : vector<16x128xf32>
    %69 = vector.broadcast %59 : vector<1x128xf32> to vector<16x128xf32>
    %70 = arith.mulf %68, %69 : vector<16x128xf32>
    %71 = vector.broadcast %60 : vector<1x128xf32> to vector<16x128xf32>
    %72 = arith.addf %70, %71 : vector<16x128xf32>
    %c536 = arith.constant 536 : index
    %c0_25 = arith.constant 0 : index
    %73 = vector.load %arg3[%c536, %c0_25] : memref<1248x128xf32, #tpu.memory_space<vmem>>, vector<128x128xf32>
    %cst_26 = arith.constant dense<0.000000e+00> : vector<16x128xf32>
    %74 = tpu.matmul %72, %73, %cst_26 {dimension_numbers = #tpu.dot_dimension_numbers<[1], [0], [0], [1], [0, 0, 1, 1], [], []>} : vector<16x128xf32>, vector<128x128xf32>, vector<16x128xf32> -> vector<16x128xf32>
    %75 = vector.extract_strided_slice %0 {offsets = [7, 0], sizes = [1, 128], strides = [1, 1]} : vector<24x128xf32> to vector<1x128xf32>
    %76 = vector.broadcast %75 : vector<1x128xf32> to vector<16x128xf32>
    %77 = arith.addf %74, %76 : vector<16x128xf32>
    %78 = arith.mulf %39, %77 : vector<16x128xf32>
    %c664 = arith.constant 664 : index
    %c0_27 = arith.constant 0 : index
    %79 = vector.load %arg3[%c664, %c0_27] : memref<1248x128xf32, #tpu.memory_space<vmem>>, vector<128x128xf32>
    %cst_28 = arith.constant dense<0.000000e+00> : vector<16x128xf32>
    %80 = tpu.matmul %78, %79, %cst_28 {dimension_numbers = #tpu.dot_dimension_numbers<[1], [0], [0], [1], [0, 0, 1, 1], [], []>} : vector<16x128xf32>, vector<128x128xf32>, vector<16x128xf32> -> vector<16x128xf32>
    %81 = arith.addf %6, %80 : vector<16x128xf32>
    %82 = vector.extract_strided_slice %0 {offsets = [8, 0], sizes = [1, 128], strides = [1, 1]} : vector<24x128xf32> to vector<1x128xf32>
    %83 = vector.broadcast %82 : vector<1x128xf32> to vector<16x128xf32>
    %84 = arith.addf %81, %83 : vector<16x128xf32>
    %85 = vector.extract_strided_slice %0 {offsets = [9, 0], sizes = [1, 128], strides = [1, 1]} : vector<24x128xf32> to vector<1x128xf32>
    %86 = vector.extract_strided_slice %0 {offsets = [10, 0], sizes = [1, 128], strides = [1, 1]} : vector<24x128xf32> to vector<1x128xf32>
    %cst_29 = arith.constant dense<0.000000e+00> : vector<16x128xf32>
    %87 = tpu.matmul %84, %7, %cst_29 {dimension_numbers = #tpu.dot_dimension_numbers<[1], [0], [0], [1], [0, 0, 1, 1], [], []>} : vector<16x128xf32>, vector<128x128xf32>, vector<16x128xf32> -> vector<16x128xf32>
    %88 = arith.subf %84, %87 : vector<16x128xf32>
    %89 = arith.mulf %88, %88 : vector<16x128xf32>
    %cst_30 = arith.constant dense<0.000000e+00> : vector<16x128xf32>
    %90 = tpu.matmul %89, %7, %cst_30 {dimension_numbers = #tpu.dot_dimension_numbers<[1], [0], [0], [1], [0, 0, 1, 1], [], []>} : vector<16x128xf32>, vector<128x128xf32>, vector<16x128xf32> -> vector<16x128xf32>
    %cst_31 = arith.constant 9.99999974E-6 : f32
    %91 = vector.broadcast %cst_31 : f32 to vector<16x128xf32>
    %92 = arith.addf %90, %91 : vector<16x128xf32>
    %93 = math.rsqrt %92 : vector<16x128xf32>
    %94 = arith.mulf %88, %93 : vector<16x128xf32>
    %95 = vector.broadcast %85 : vector<1x128xf32> to vector<16x128xf32>
    %96 = arith.mulf %94, %95 : vector<16x128xf32>
    %97 = vector.broadcast %86 : vector<1x128xf32> to vector<16x128xf32>
    %98 = arith.addf %96, %97 : vector<16x128xf32>
    %c792 = arith.constant 792 : index
    %c0_32 = arith.constant 0 : index
    %99 = vector.load %arg3[%c792, %c0_32] : memref<1248x128xf32, #tpu.memory_space<vmem>>, vector<128x64xf32>
    %cst_33 = arith.constant dense<0.000000e+00> : vector<16x64xf32>
    %100 = tpu.matmul %98, %99, %cst_33 {dimension_numbers = #tpu.dot_dimension_numbers<[1], [0], [0], [1], [0, 0, 1, 1], [], []>} : vector<16x128xf32>, vector<128x64xf32>, vector<16x64xf32> -> vector<16x64xf32>
    %101 = vector.extract_strided_slice %0 {offsets = [11, 0], sizes = [1, 64], strides = [1, 1]} : vector<24x128xf32> to vector<1x64xf32>
    %102 = vector.broadcast %101 : vector<1x64xf32> to vector<16x64xf32>
    %103 = arith.addf %100, %102 : vector<16x64xf32>
    %104 = vector.extract_strided_slice %0 {offsets = [12, 0], sizes = [1, 128], strides = [1, 1]} : vector<24x128xf32> to vector<1x128xf32>
    %105 = vector.extract_strided_slice %0 {offsets = [13, 0], sizes = [1, 128], strides = [1, 1]} : vector<24x128xf32> to vector<1x128xf32>
    %cst_34 = arith.constant 0.000000e+00 : f32
    %106 = vector.broadcast %cst_34 : f32 to vector<2x128xf32>
    %107 = vector.extract_strided_slice %103 {offsets = [0, 0], sizes = [2, 64], strides = [1, 1]} : vector<16x64xf32> to vector<2x64xf32>
    %108 = vector.extract_strided_slice %103 {offsets = [14, 0], sizes = [2, 64], strides = [1, 1]} : vector<16x64xf32> to vector<2x64xf32>
    %109 = tpu.concatenate %107, %108 in 1 : vector<2x64xf32>, vector<2x64xf32> -> vector<2x128xf32>
    %110 = vector.broadcast %104 : vector<1x128xf32> to vector<2x128xf32>
    %111 = arith.mulf %110, %106 : vector<2x128xf32>
    %112 = vector.broadcast %105 : vector<1x128xf32> to vector<2x128xf32>
    %113 = arith.mulf %112, %109 : vector<2x128xf32>
    %114 = arith.addf %111, %113 : vector<2x128xf32>
    %115 = vector.extract_strided_slice %114 {offsets = [0, 0], sizes = [2, 64], strides = [1, 1]} : vector<2x128xf32> to vector<2x64xf32>
    %116 = vector.extract_strided_slice %114 {offsets = [0, 64], sizes = [2, 64], strides = [1, 1]} : vector<2x128xf32> to vector<2x64xf32>
    %117 = vector.extract_strided_slice %103 {offsets = [2, 0], sizes = [2, 64], strides = [1, 1]} : vector<16x64xf32> to vector<2x64xf32>
    %118 = vector.extract_strided_slice %103 {offsets = [12, 0], sizes = [2, 64], strides = [1, 1]} : vector<16x64xf32> to vector<2x64xf32>
    %119 = tpu.concatenate %117, %118 in 1 : vector<2x64xf32>, vector<2x64xf32> -> vector<2x128xf32>
    %120 = vector.broadcast %104 : vector<1x128xf32> to vector<2x128xf32>
    %121 = arith.mulf %120, %114 : vector<2x128xf32>
    %122 = vector.broadcast %105 : vector<1x128xf32> to vector<2x128xf32>
    %123 = arith.mulf %122, %119 : vector<2x128xf32>
    %124 = arith.addf %121, %123 : vector<2x128xf32>
    %125 = vector.extract_strided_slice %124 {offsets = [0, 0], sizes = [2, 64], strides = [1, 1]} : vector<2x128xf32> to vector<2x64xf32>
    %126 = vector.extract_strided_slice %124 {offsets = [0, 64], sizes = [2, 64], strides = [1, 1]} : vector<2x128xf32> to vector<2x64xf32>
    %127 = vector.extract_strided_slice %103 {offsets = [4, 0], sizes = [2, 64], strides = [1, 1]} : vector<16x64xf32> to vector<2x64xf32>
    %128 = vector.extract_strided_slice %103 {offsets = [10, 0], sizes = [2, 64], strides = [1, 1]} : vector<16x64xf32> to vector<2x64xf32>
    %129 = tpu.concatenate %127, %128 in 1 : vector<2x64xf32>, vector<2x64xf32> -> vector<2x128xf32>
    %130 = vector.broadcast %104 : vector<1x128xf32> to vector<2x128xf32>
    %131 = arith.mulf %130, %124 : vector<2x128xf32>
    %132 = vector.broadcast %105 : vector<1x128xf32> to vector<2x128xf32>
    %133 = arith.mulf %132, %129 : vector<2x128xf32>
    %134 = arith.addf %131, %133 : vector<2x128xf32>
    %135 = vector.extract_strided_slice %134 {offsets = [0, 0], sizes = [2, 64], strides = [1, 1]} : vector<2x128xf32> to vector<2x64xf32>
    %136 = vector.extract_strided_slice %134 {offsets = [0, 64], sizes = [2, 64], strides = [1, 1]} : vector<2x128xf32> to vector<2x64xf32>
    %137 = vector.extract_strided_slice %103 {offsets = [6, 0], sizes = [2, 64], strides = [1, 1]} : vector<16x64xf32> to vector<2x64xf32>
    %138 = vector.extract_strided_slice %103 {offsets = [8, 0], sizes = [2, 64], strides = [1, 1]} : vector<16x64xf32> to vector<2x64xf32>
    %139 = tpu.concatenate %137, %138 in 1 : vector<2x64xf32>, vector<2x64xf32> -> vector<2x128xf32>
    %140 = vector.broadcast %104 : vector<1x128xf32> to vector<2x128xf32>
    %141 = arith.mulf %140, %134 : vector<2x128xf32>
    %142 = vector.broadcast %105 : vector<1x128xf32> to vector<2x128xf32>
    %143 = arith.mulf %142, %139 : vector<2x128xf32>
    %144 = arith.addf %141, %143 : vector<2x128xf32>
    %145 = vector.extract_strided_slice %144 {offsets = [0, 0], sizes = [2, 64], strides = [1, 1]} : vector<2x128xf32> to vector<2x64xf32>
    %146 = vector.extract_strided_slice %144 {offsets = [0, 64], sizes = [2, 64], strides = [1, 1]} : vector<2x128xf32> to vector<2x64xf32>
    %147 = vector.extract_strided_slice %103 {offsets = [8, 0], sizes = [2, 64], strides = [1, 1]} : vector<16x64xf32> to vector<2x64xf32>
    %148 = vector.extract_strided_slice %103 {offsets = [6, 0], sizes = [2, 64], strides = [1, 1]} : vector<16x64xf32> to vector<2x64xf32>
    %149 = tpu.concatenate %147, %148 in 1 : vector<2x64xf32>, vector<2x64xf32> -> vector<2x128xf32>
    %150 = vector.broadcast %104 : vector<1x128xf32> to vector<2x128xf32>
    %151 = arith.mulf %150, %144 : vector<2x128xf32>
    %152 = vector.broadcast %105 : vector<1x128xf32> to vector<2x128xf32>
    %153 = arith.mulf %152, %149 : vector<2x128xf32>
    %154 = arith.addf %151, %153 : vector<2x128xf32>
    %155 = vector.extract_strided_slice %154 {offsets = [0, 0], sizes = [2, 64], strides = [1, 1]} : vector<2x128xf32> to vector<2x64xf32>
    %156 = vector.extract_strided_slice %154 {offsets = [0, 64], sizes = [2, 64], strides = [1, 1]} : vector<2x128xf32> to vector<2x64xf32>
    %157 = vector.extract_strided_slice %103 {offsets = [10, 0], sizes = [2, 64], strides = [1, 1]} : vector<16x64xf32> to vector<2x64xf32>
    %158 = vector.extract_strided_slice %103 {offsets = [4, 0], sizes = [2, 64], strides = [1, 1]} : vector<16x64xf32> to vector<2x64xf32>
    %159 = tpu.concatenate %157, %158 in 1 : vector<2x64xf32>, vector<2x64xf32> -> vector<2x128xf32>
    %160 = vector.broadcast %104 : vector<1x128xf32> to vector<2x128xf32>
    %161 = arith.mulf %160, %154 : vector<2x128xf32>
    %162 = vector.broadcast %105 : vector<1x128xf32> to vector<2x128xf32>
    %163 = arith.mulf %162, %159 : vector<2x128xf32>
    %164 = arith.addf %161, %163 : vector<2x128xf32>
    %165 = vector.extract_strided_slice %164 {offsets = [0, 0], sizes = [2, 64], strides = [1, 1]} : vector<2x128xf32> to vector<2x64xf32>
    %166 = vector.extract_strided_slice %164 {offsets = [0, 64], sizes = [2, 64], strides = [1, 1]} : vector<2x128xf32> to vector<2x64xf32>
    %167 = vector.extract_strided_slice %103 {offsets = [12, 0], sizes = [2, 64], strides = [1, 1]} : vector<16x64xf32> to vector<2x64xf32>
    %168 = vector.extract_strided_slice %103 {offsets = [2, 0], sizes = [2, 64], strides = [1, 1]} : vector<16x64xf32> to vector<2x64xf32>
    %169 = tpu.concatenate %167, %168 in 1 : vector<2x64xf32>, vector<2x64xf32> -> vector<2x128xf32>
    %170 = vector.broadcast %104 : vector<1x128xf32> to vector<2x128xf32>
    %171 = arith.mulf %170, %164 : vector<2x128xf32>
    %172 = vector.broadcast %105 : vector<1x128xf32> to vector<2x128xf32>
    %173 = arith.mulf %172, %169 : vector<2x128xf32>
    %174 = arith.addf %171, %173 : vector<2x128xf32>
    %175 = vector.extract_strided_slice %174 {offsets = [0, 0], sizes = [2, 64], strides = [1, 1]} : vector<2x128xf32> to vector<2x64xf32>
    %176 = vector.extract_strided_slice %174 {offsets = [0, 64], sizes = [2, 64], strides = [1, 1]} : vector<2x128xf32> to vector<2x64xf32>
    %177 = vector.extract_strided_slice %103 {offsets = [14, 0], sizes = [2, 64], strides = [1, 1]} : vector<16x64xf32> to vector<2x64xf32>
    %178 = vector.extract_strided_slice %103 {offsets = [0, 0], sizes = [2, 64], strides = [1, 1]} : vector<16x64xf32> to vector<2x64xf32>
    %179 = tpu.concatenate %177, %178 in 1 : vector<2x64xf32>, vector<2x64xf32> -> vector<2x128xf32>
    %180 = vector.broadcast %104 : vector<1x128xf32> to vector<2x128xf32>
    %181 = arith.mulf %180, %174 : vector<2x128xf32>
    %182 = vector.broadcast %105 : vector<1x128xf32> to vector<2x128xf32>
    %183 = arith.mulf %182, %179 : vector<2x128xf32>
    %184 = arith.addf %181, %183 : vector<2x128xf32>
    %185 = vector.extract_strided_slice %184 {offsets = [0, 0], sizes = [2, 64], strides = [1, 1]} : vector<2x128xf32> to vector<2x64xf32>
    %186 = vector.extract_strided_slice %184 {offsets = [0, 64], sizes = [2, 64], strides = [1, 1]} : vector<2x128xf32> to vector<2x64xf32>
    %187 = tpu.concatenate %115, %125, %135, %145, %155, %165, %175, %185 in 0 : vector<2x64xf32>, vector<2x64xf32>, vector<2x64xf32>, vector<2x64xf32>, vector<2x64xf32>, vector<2x64xf32>, vector<2x64xf32>, vector<2x64xf32> -> vector<16x64xf32>
    %188 = tpu.concatenate %186, %176, %166, %156, %146, %136, %126, %116 in 0 : vector<2x64xf32>, vector<2x64xf32>, vector<2x64xf32>, vector<2x64xf32>, vector<2x64xf32>, vector<2x64xf32>, vector<2x64xf32>, vector<2x64xf32> -> vector<16x64xf32>
    %c920 = arith.constant 920 : index
    %c0_35 = arith.constant 0 : index
    %189 = vector.load %arg3[%c920, %c0_35] : memref<1248x128xf32, #tpu.memory_space<vmem>>, vector<64x128xf32>
    %cst_36 = arith.constant dense<0.000000e+00> : vector<16x128xf32>
    %190 = tpu.matmul %187, %189, %cst_36 {dimension_numbers = #tpu.dot_dimension_numbers<[1], [0], [0], [1], [0, 0, 1, 1], [], []>} : vector<16x64xf32>, vector<64x128xf32>, vector<16x128xf32> -> vector<16x128xf32>
    %191 = arith.addf %84, %190 : vector<16x128xf32>
    %c984 = arith.constant 984 : index
    %c0_37 = arith.constant 0 : index
    %192 = vector.load %arg3[%c984, %c0_37] : memref<1248x128xf32, #tpu.memory_space<vmem>>, vector<64x128xf32>
    %cst_38 = arith.constant dense<0.000000e+00> : vector<16x128xf32>
    %193 = tpu.matmul %188, %192, %cst_38 {dimension_numbers = #tpu.dot_dimension_numbers<[1], [0], [0], [1], [0, 0, 1, 1], [], []>} : vector<16x64xf32>, vector<64x128xf32>, vector<16x128xf32> -> vector<16x128xf32>
    %194 = arith.addf %191, %193 : vector<16x128xf32>
    %195 = vector.extract_strided_slice %0 {offsets = [14, 0], sizes = [1, 128], strides = [1, 1]} : vector<24x128xf32> to vector<1x128xf32>
    %196 = vector.broadcast %195 : vector<1x128xf32> to vector<16x128xf32>
    %197 = arith.addf %194, %196 : vector<16x128xf32>
    %c0_39 = arith.constant 0 : index
    %c0_40 = arith.constant 0 : index
    %198 = vector.load %arg4[%c0_39, %c0_40] : memref<136x256xf32, #tpu.memory_space<vmem>>, vector<128x160xf32>
    %cst_41 = arith.constant dense<0.000000e+00> : vector<16x160xf32>
    %199 = tpu.matmul %197, %198, %cst_41 {dimension_numbers = #tpu.dot_dimension_numbers<[1], [0], [0], [1], [0, 0, 1, 1], [], []>} : vector<16x128xf32>, vector<128x160xf32>, vector<16x160xf32> -> vector<16x160xf32>
    %c128 = arith.constant 128 : index
    %c0_42 = arith.constant 0 : index
    %200 = vector.load %arg4[%c128, %c0_42] : memref<136x256xf32, #tpu.memory_space<vmem>>, vector<1x160xf32>
    %201 = vector.broadcast %200 : vector<1x160xf32> to vector<16x160xf32>
    %202 = arith.addf %199, %201 : vector<16x160xf32>
    %203 = arith.mulf %202, %202 : vector<16x160xf32>
    %204 = arith.mulf %202, %203 : vector<16x160xf32>
    %cst_43 = arith.constant 4.471500e-02 : f32
    %205 = vector.broadcast %cst_43 : f32 to vector<16x160xf32>
    %206 = arith.mulf %205, %204 : vector<16x160xf32>
    %207 = arith.addf %202, %206 : vector<16x160xf32>
    %cst_44 = arith.constant 0.797884583 : f32
    %208 = vector.broadcast %cst_44 : f32 to vector<16x160xf32>
    %209 = arith.mulf %208, %207 : vector<16x160xf32>
    %210 = math.tanh %209 : vector<16x160xf32>
    %cst_45 = arith.constant 1.000000e+00 : f32
    %211 = vector.broadcast %cst_45 : f32 to vector<16x160xf32>
    %212 = arith.addf %211, %210 : vector<16x160xf32>
    %cst_46 = arith.constant 5.000000e-01 : f32
    %213 = vector.broadcast %cst_46 : f32 to vector<16x160xf32>
    %214 = arith.mulf %213, %212 : vector<16x160xf32>
    %215 = arith.mulf %202, %214 : vector<16x160xf32>
    %c1048 = arith.constant 1048 : index
    %c0_47 = arith.constant 0 : index
    %216 = vector.load %arg3[%c1048, %c0_47] : memref<1248x128xf32, #tpu.memory_space<vmem>>, vector<160x32xf32>
    %cst_48 = arith.constant dense<0.000000e+00> : vector<16x32xf32>
    %217 = tpu.matmul %215, %216, %cst_48 {dimension_numbers = #tpu.dot_dimension_numbers<[1], [0], [0], [1], [0, 0, 1, 1], [], []>} : vector<16x160xf32>, vector<160x32xf32>, vector<16x32xf32> -> vector<16x32xf32>
    %218 = vector.extract_strided_slice %0 {offsets = [15, 0], sizes = [1, 32], strides = [1, 1]} : vector<24x128xf32> to vector<1x32xf32>
    %219 = vector.broadcast %218 : vector<1x32xf32> to vector<16x32xf32>
    %220 = arith.addf %217, %219 : vector<16x32xf32>
    %c1208 = arith.constant 1208 : index
    %c0_49 = arith.constant 0 : index
    %221 = vector.load %arg3[%c1208, %c0_49] : memref<1248x128xf32, #tpu.memory_space<vmem>>, vector<2x16xf32>
    %cst_50 = arith.constant dense<0.000000e+00> : vector<2x32xf32>
    %222 = tpu.matmul %221, %220, %cst_50 {dimension_numbers = #tpu.dot_dimension_numbers<[1], [0], [0], [1], [0, 0, 1, 1], [], []>} : vector<2x16xf32>, vector<16x32xf32>, vector<2x32xf32> -> vector<2x32xf32>
    %c1216 = arith.constant 1216 : index
    %c0_51 = arith.constant 0 : index
    %223 = vector.load %arg3[%c1216, %c0_51] : memref<1248x128xf32, #tpu.memory_space<vmem>>, vector<32x32xf32>
    %cst_52 = arith.constant dense<0.000000e+00> : vector<2x32xf32>
    %224 = tpu.matmul %222, %223, %cst_52 {dimension_numbers = #tpu.dot_dimension_numbers<[1], [0], [0], [1], [0, 0, 1, 1], [], []>} : vector<2x32xf32>, vector<32x32xf32>, vector<2x32xf32> -> vector<2x32xf32>
    %225 = vector.extract_strided_slice %0 {offsets = [16, 0], sizes = [1, 32], strides = [1, 1]} : vector<24x128xf32> to vector<1x32xf32>
    %226 = vector.broadcast %225 : vector<1x32xf32> to vector<2x32xf32>
    %227 = arith.addf %224, %226 : vector<2x32xf32>
    %228 = arith.mulf %227, %227 : vector<2x32xf32>
    %229 = arith.mulf %227, %228 : vector<2x32xf32>
    %cst_53 = arith.constant 4.471500e-02 : f32
    %230 = vector.broadcast %cst_53 : f32 to vector<2x32xf32>
    %231 = arith.mulf %230, %229 : vector<2x32xf32>
    %232 = arith.addf %227, %231 : vector<2x32xf32>
    %cst_54 = arith.constant 0.797884583 : f32
    %233 = vector.broadcast %cst_54 : f32 to vector<2x32xf32>
    %234 = arith.mulf %233, %232 : vector<2x32xf32>
    %235 = math.tanh %234 : vector<2x32xf32>
    %cst_55 = arith.constant 1.000000e+00 : f32
    %236 = vector.broadcast %cst_55 : f32 to vector<2x32xf32>
    %237 = arith.addf %236, %235 : vector<2x32xf32>
    %cst_56 = arith.constant 5.000000e-01 : f32
    %238 = vector.broadcast %cst_56 : f32 to vector<2x32xf32>
    %239 = arith.mulf %238, %237 : vector<2x32xf32>
    %240 = arith.mulf %227, %239 : vector<2x32xf32>
    %241 = vector.extract_strided_slice %0 {offsets = [17, 0], sizes = [1, 32], strides = [1, 1]} : vector<24x128xf32> to vector<1x32xf32>
    %242 = vector.broadcast %241 : vector<1x32xf32> to vector<2x32xf32>
    %243 = arith.mulf %240, %242 : vector<2x32xf32>
    %cst_57 = arith.constant dense<0.000000e+00> : vector<2xf32>
    %244 = vector.multi_reduction <add>, %243, %cst_57 [1] : vector<2x32xf32> to vector<2xf32>
    %245 = vector.shape_cast %244 : vector<2xf32> to vector<2x1xf32>
    %246 = vector.extract_strided_slice %0 {offsets = [18, 0], sizes = [1, 1], strides = [1, 1]} : vector<24x128xf32> to vector<1x1xf32>
    %247 = vector.broadcast %246 : vector<1x1xf32> to vector<2x1xf32>
    %248 = arith.addf %245, %247 : vector<2x1xf32>
    %249 = arith.negf %248 : vector<2x1xf32>
    %250 = math.exp %249 : vector<2x1xf32>
    %cst_58 = arith.constant 1.000000e+00 : f32
    %251 = vector.broadcast %cst_58 : f32 to vector<2x1xf32>
    %252 = arith.addf %251, %250 : vector<2x1xf32>
    %253 = arith.divf %251, %252 : vector<2x1xf32>
    %c0_59 = arith.constant 0 : index
    %c0_60 = arith.constant 0 : index
    %254 = vector.load %arg5[%c0_59, %c0_60] : memref<2x1xf32, #tpu.memory_space<vmem>>, vector<2x1xf32>
    tpu.vector_store %arg5[%c0_59, %c0_60], %253 {strides = array<i32>} : memref<2x1xf32, #tpu.memory_space<vmem>>, vector<2x1xf32>,
    return
  }
  func.func @transform_0(%arg0: i32) -> (i32, i32) {
    %c0_i32 = arith.constant 0 : i32
    %c0_i32_0 = arith.constant 0 : i32
    %c0_i32_1 = arith.constant 0 : i32
    return %c0_i32, %c0_i32_0 : i32, i32
  }
  func.func @transform_1(%arg0: i32) -> (i32, i32) {
    %c0_i32 = arith.constant 0 : i32
    %c0_i32_0 = arith.constant 0 : i32
    %c0_i32_1 = arith.constant 0 : i32
    return %c0_i32, %c0_i32_0 : i32, i32
  }
  func.func @transform_2(%arg0: i32) -> (i32, i32) {
    %c0_i32 = arith.constant 0 : i32
    %c0_i32_0 = arith.constant 0 : i32
    %c0_i32_1 = arith.constant 0 : i32
    return %c0_i32, %c0_i32_0 : i32, i32
  }
  func.func @transform_3(%arg0: i32) -> (i32, i32) {
    %c0_i32 = arith.constant 0 : i32
    %c0_i32_0 = arith.constant 0 : i32
    %c0_i32_1 = arith.constant 0 : i32
    return %c0_i32, %c0_i32_0 : i32, i32
  }
  func.func @transform_4(%arg0: i32) -> (i32, i32) {
    %c0_i32 = arith.constant 0 : i32
    %c0_i32_0 = arith.constant 0 : i32
    %c0_i32_1 = arith.constant 0 : i32
    return %c0_i32, %c0_i32_0 : i32, i32
  }
}

</mosaic_0001>

<llo_original>
// kernel: forward.1
$region0: #{forward.1}
  #allocation0 [shape = 'u32[]', space=smem, size = 0x4, offset = 0x4, fixed_abs, tag = 'smem constant byte address 0x4 - core index']
  #allocation1 [shape = 'u32[144,128]{1,0:T(1,128)}', space=vmem, size = 0x12000, scoped, tag = 'internal scratch']
  %s0 = inlined_call_operand.vmem [shape: f32[16,24], index: 0, kind: input, shape index: {}]
  %s1 = inlined_call_operand.vmem [shape: f32[24,128], index: 1, kind: input, shape index: {}]
  %s2 = inlined_call_operand.hbm [shape: f32[1248,128], index: 2, kind: input, shape index: {}]
  %s3 = inlined_call_operand.hbm [shape: f32[136,256], index: 3, kind: input, shape index: {}]
  %s4 = inlined_call_operand.vmem [shape: f32[2,1], index: 4, kind: output, shape index: {}]
  %s5 = sld [smem:[#allocation0]]
  $region34: #{forward.1} parent=0
    _
  %s7 = ssub.s32 1, %s5
  %s8 = scalar_select 0, %s7, %s5
  $region1: #{forward.1} parent=0
    #allocation2 [shape = 'u8[638976]{0}', space=vmem, size = 0x9c000, scoped, tag = 'input window, operand 2, single buffered']
    #allocation3 [shape = 's32[1]{0}', space=sflag, size = 0x4, scoped, tag = 'scoped memory for forward.1']
    #allocation4 [shape = 'u8[139264]{0}', space=vmem, size = 0x22000, scoped, tag = 'input window, operand 3, single buffered']
    #allocation5 [shape = 's32[1]{0}', space=sflag, size = 0x4, scoped, tag = 'scoped memory for forward.1']
    %9 = vsyncpa [#allocation3], 0
    %10 = vsyncpa [#allocation5], 0
    // Predicated region
    $region2: #{forward.1} parent=1 // pred_check
      _
    $region3: #{forward.1} parent=1 // pred_check_branch
      %12 = sbr.rel (0) target = $region5
    $region4: #{forward.1} parent=1 // pred_region
      _
    $region5: #{forward.1} parent=1 // pred_fallthru
      _
    // Predicated region
    $region6: #{forward.1} parent=1 // pred_check
      _
    $region7: #{forward.1} parent=1 // pred_check_branch
      %14 = sbr.rel (0) target = $region9
    $region8: #{forward.1} parent=1 // pred_region
      _
    $region9: #{forward.1} parent=1 // pred_fallthru
      _
    // Predicated region
    $region10: #{forward.1} parent=1 // pred_check
      _
    $region11: #{forward.1} parent=1 // pred_check_branch
      %16 = sbr.rel (0) target = $region13
    $region12: #{forward.1} parent=1 // pred_region
      %s18 = ssub.s32 19968, 19968
      %19 = vsyncadd [#allocation3], %s18
      %s20 = sshll.u32 [#allocation2], 4
      %s21 = int_to_ptr.vmem [resolvable:$true] %s20
      %26 = dma.hbm_to_vmem [thread:$0]  %s2, 19968, %s21, [#allocation3], 128, 128, 8
    $region13: #{forward.1} parent=1 // pred_fallthru
      _
    // Predicated region
    $region14: #{forward.1} parent=1 // pred_check
      _
    $region15: #{forward.1} parent=1 // pred_check_branch
      %28 = sbr.rel (0) target = $region17
    $region16: #{forward.1} parent=1 // pred_region
      %s30 = ssub.s32 4352, 4352
      %31 = vsyncadd [#allocation5], %s30
      %s32 = sshll.u32 [#allocation4], 4
      %s33 = int_to_ptr.vmem [resolvable:$true] %s32
      %38 = dma.hbm_to_vmem [thread:$0]  %s3, 4352, %s33, [#allocation5], 256, 256, 16
    $region17: #{forward.1} parent=1 // pred_fallthru
      _
    // Predicated region
    $region18: #{forward.1} parent=1 // pred_check
      _
    $region19: #{forward.1} parent=1 // pred_check_branch
      %40 = sbr.rel (0) target = $region21
    $region20: #{forward.1} parent=1 // pred_region
      %41 = dma.done [#allocation3], 19968
    $region21: #{forward.1} parent=1 // pred_fallthru
      _
    // Predicated region
    $region22: #{forward.1} parent=1 // pred_check
      _
    $region23: #{forward.1} parent=1 // pred_check_branch
      %43 = sbr.rel (0) target = $region25
    $region24: #{forward.1} parent=1 // pred_region
      %44 = dma.done [#allocation5], 4352
    $region25: #{forward.1} parent=1 // pred_fallthru
      _
    %v45 = vld [vmem:[%s1] sm:$0xff]
    %v46 = vld [vmem:[%s1 + $0x8] sm:$0xff]
    %v47 = vld [vmem:[%s1 + $0x10] sm:$0xff]
    %v48 = vld [vmem:[%s0] sm:$0xff]
    %v49 = vld [vmem:[%s0 + $0x8] sm:$0xff]
    %v50 = vld [vmem:[#allocation2] sm:$0xff]
    %v51 = vld [vmem:[#allocation2 + $0x8] sm:$0xff]
    %v52 = vld [vmem:[#allocation2 + $0x10] sm:$0xff]
    %v53 = vlaneseq
    %v54 = vshrl.u32 %v53, 7
    %v55 = vsub.s32 0, %v54
    %v56 = vrot.slane %v45, %v55
    %vm57 = vcmask 195584
    %v59 = vsel %vm57, %v48, 0
    %v62 = vsel %vm57, %v49, 0
    %64 = vmatprep.subr.mxu0 0.0
    %65 = vmatpush1.msra.mxu0 %v50
    %66 = vmatprep.subr.mxu0 0.0
    %67 = vmatpush1.msra.mxu0 %v51
    %68 = vmatprep.subr.mxu0 0.0
    %69 = vmatpush1.msra.mxu0 %v52
    %70 = vmatprep.subr.mxu0 0.0
    %71 = vmatpush1.msra.mxu0 0.0
    %72 = vmatprep.subr.mxu0 0.0
    %73 = vmatpush1.msra.mxu0 0.0
    %74 = vmatprep.subr.mxu0 0.0
    %75 = vmatpush1.msra.mxu0 0.0
    %76 = vmatprep.subr.mxu0 0.0
    %77 = vmatpush1.msra.mxu0 0.0
    %78 = vmatprep.subr.mxu0 0.0
    %79 = vmatpush1.msra.mxu0 0.0
    %80 = vmatprep.subr.mxu0 0.0
    %81 = vmatpush1.msra.mxu0 0.0
    %82 = vmatprep.subr.mxu0 0.0
    %83 = vmatpush1.msra.mxu0 0.0
    %84 = vmatprep.subr.mxu0 0.0
    %85 = vmatpush1.msra.mxu0 0.0
    %86 = vmatprep.subr.mxu0 0.0
    %87 = vmatpush1.msra.mxu0 0.0
    %88 = vmatprep.subr.mxu0 0.0
    %89 = vmatpush1.msra.mxu0 0.0
    %90 = vmatprep.subr.mxu0 0.0
    %91 = vmatpush1.msra.mxu0 0.0
    %92 = vmatprep.subr.mxu0 0.0
    %93 = vmatpush1.msra.mxu0 0.0
    %94 = vmatprep.subr.mxu0 0.0
    %95 = vmatpush1.msra.mxu0 0.0
    %96 = vmatprep.subr.mxu0 0.0
    %97 = vmatpush1.msra.mxu0 0.0
    %98 = vmatprep.subr.mxu0 0.0
    %99 = vmatpush1.msra.mxu0 0.0
    %100 = vmatprep.subr.mxu0 0.0
    %101 = vmatpush1.msra.mxu0 0.0
    %102 = vmatprep.subr.mxu0 0.0
    %103 = vmatpush1.msra.mxu0 0.0
    %104 = vmatprep.subr.mxu0 0.0
    %105 = vmatpush1.msra.mxu0 0.0
    %106 = vmatprep.subr.mxu0 0.0
    %107 = vmatpush1.msra.mxu0 0.0
    %108 = vmatprep.subr.mxu0 0.0
    %109 = vmatpush1.msra.mxu0 0.0
    %110 = vmatprep.subr.mxu0 0.0
    %111 = vmatpush1.msra.mxu0 0.0
    %112 = vmatprep.subr.mxu0 0.0
    %113 = vmatpush1.msra.mxu0 0.0
    %114 = vmatprep.subr.mxu0 0.0
    %115 = vmatpush1.msra.mxu0 0.0
    %116 = vmatprep.subr.mxu0 0.0
    %117 = vmatpush1.msra.mxu0 0.0
    %118 = vmatprep.subr.mxu0 0.0
    %119 = vmatpush1.msra.mxu0 0.0
    %120 = vmatprep.subr.mxu0 0.0
    %121 = vmatpush1.msra.mxu0 0.0
    %122 = vmatprep.subr.mxu0 0.0
    %123 = vmatpush1.msra.mxu0 0.0
    %124 = vmatprep.subr.mxu0 0.0
    %125 = vmatpush1.msra.mxu0 0.0
    %126 = vmatprep.subr.mxu0 0.0
    %127 = vmatpush1.msra.mxu0 0.0
    %128 = vmatprep.mubr.f32.mxu0 0.0
    %129 = vmatmul.mubr.f32.gmra.mrb[0].mxu0 %v59
    %v130 = vpop.f32.mrb[0].mxu0
    %v131 = vadd.f32 %v56, %v130
    %v132 = vpop.f32.mrb[0].mxu0
    %133 = vmatprep.mubr.f32.mxu0 0.0
    %134 = vmatmul.mubr.f32.gmra.mrb[0].mxu0 %v62
    %v135 = vpop.f32.mrb[0].mxu0
    %v136 = vadd.f32 %v56, %v135
    %v137 = vpop.f32.mrb[0].mxu0
    %138 = vdwg.mxu0
    %v139 = vld [vmem:[#allocation2 + $0x18] sm:$0xff]
    %v140 = vld [vmem:[#allocation2 + $0x20] sm:$0xff]
    %v141 = vld [vmem:[#allocation2 + $0x28] sm:$0xff]
    %v142 = vld [vmem:[#allocation2 + $0x30] sm:$0xff]
    %v143 = vld [vmem:[#allocation2 + $0x38] sm:$0xff]
    %v144 = vld [vmem:[#allocation2 + $0x40] sm:$0xff]
    %v145 = vld [vmem:[#allocation2 + $0x48] sm:$0xff]
    %v146 = vld [vmem:[#allocation2 + $0x50] sm:$0xff]
    %v147 = vld [vmem:[#allocation2 + $0x58] sm:$0xff]
    %v148 = vld [vmem:[#allocation2 + $0x60] sm:$0xff]
    %v149 = vld [vmem:[#allocation2 + $0x68] sm:$0xff]
    %v150 = vld [vmem:[#allocation2 + $0x70] sm:$0xff]
    %v151 = vld [vmem:[#allocation2 + $0x78] sm:$0xff]
    %v152 = vld [vmem:[#allocation2 + $0x80] sm:$0xff]
    %v153 = vld [vmem:[#allocation2 + $0x88] sm:$0xff]
    %v154 = vld [vmem:[#allocation2 + $0x90] sm:$0xff]
    %155 = vmatprep.subr.mxu0 0.0
    %156 = vmatpush1.msra.mxu0 %v139
    %157 = vmatprep.subr.mxu0 0.0
    %158 = vmatpush1.msra.mxu0 %v140
    %159 = vmatprep.subr.mxu0 0.0
    %160 = vmatpush1.msra.mxu0 %v141
    %161 = vmatprep.subr.mxu0 0.0
    %162 = vmatpush1.msra.mxu0 %v142
    %163 = vmatprep.subr.mxu0 0.0
    %164 = vmatpush1.msra.mxu0 %v143
    %165 = vmatprep.subr.mxu0 0.0
    %166 = vmatpush1.msra.mxu0 %v144
    %167 = vmatprep.subr.mxu0 0.0
    %168 = vmatpush1.msra.mxu0 %v145
    %169 = vmatprep.subr.mxu0 0.0
    %170 = vmatpush1.msra.mxu0 %v146
    %171 = vmatprep.subr.mxu0 0.0
    %172 = vmatpush1.msra.mxu0 %v147
    %173 = vmatprep.subr.mxu0 0.0
    %174 = vmatpush1.msra.mxu0 %v148
    %175 = vmatprep.subr.mxu0 0.0
    %176 = vmatpush1.msra.mxu0 %v149
    %177 = vmatprep.subr.mxu0 0.0
    %178 = vmatpush1.msra.mxu0 %v150
    %179 = vmatprep.subr.mxu0 0.0
    %180 = vmatpush1.msra.mxu0 %v151
    %181 = vmatprep.subr.mxu0 0.0
    %182 = vmatpush1.msra.mxu0 %v152
    %183 = vmatprep.subr.mxu0 0.0
    %184 = vmatpush1.msra.mxu0 %v153
    %185 = vmatprep.subr.mxu0 0.0
    %186 = vmatpush1.msra.mxu0 %v154
    %187 = vmatprep.subr.mxu0 0.0
    %188 = vmatpush1.msra.mxu0 0.0
    %189 = vmatprep.subr.mxu0 0.0
    %190 = vmatpush1.msra.mxu0 0.0
    %191 = vmatprep.subr.mxu0 0.0
    %192 = vmatpush1.msra.mxu0 0.0
    %193 = vmatprep.subr.mxu0 0.0
    %194 = vmatpush1.msra.mxu0 0.0
    %195 = vmatprep.subr.mxu0 0.0
    %196 = vmatpush1.msra.mxu0 0.0
    %197 = vmatprep.subr.mxu0 0.0
    %198 = vmatpush1.msra.mxu0 0.0
    %199 = vmatprep.subr.mxu0 0.0
    %200 = vmatpush1.msra.mxu0 0.0
    %201 = vmatprep.subr.mxu0 0.0
    %202 = vmatpush1.msra.mxu0 0.0
    %203 = vmatprep.subr.mxu0 0.0
    %204 = vmatpush1.msra.mxu0 0.0
    %205 = vmatprep.subr.mxu0 0.0
    %206 = vmatpush1.msra.mxu0 0.0
    %207 = vmatprep.subr.mxu0 0.0
    %208 = vmatpush1.msra.mxu0 0.0
    %209 = vmatprep.subr.mxu0 0.0
    %210 = vmatpush1.msra.mxu0 0.0
    %211 = vmatprep.subr.mxu0 0.0
    %212 = vmatpush1.msra.mxu0 0.0
    %213 = vmatprep.subr.mxu0 0.0
    %214 = vmatpush1.msra.mxu0 0.0
    %215 = vmatprep.subr.mxu0 0.0
    %216 = vmatpush1.msra.mxu0 0.0
    %217 = vmatprep.subr.mxu0 0.0
    %218 = vmatpush1.msra.mxu0 0.0
    %219 = vmatprep.mubr.f32.mxu0 0.0
    %220 = vmatmul.mubr.f32.gmra.mrb[0].mxu0 %v131
    %v221 = vpop.f32.mrb[0].mxu0
    %v222 = vadd.f32 0.0, %v221
    %v223 = vpop.f32.mrb[0].mxu0
    %224 = vmatprep.mubr.f32.mxu0 0.0
    %225 = vmatmul.mubr.f32.gmra.mrb[0].mxu0 %v136
    %v226 = vpop.f32.mrb[0].mxu0
    %v227 = vadd.f32 0.0, %v226
    %v228 = vpop.f32.mrb[0].mxu0
    %229 = vdwg.mxu0
    %v230 = vsub.f32 %v131, %v222
    %v231 = vsub.f32 %v136, %v227
    %v232 = vmul.f32 %v230, %v230
    %v233 = vmul.f32 %v231, %v231
    %234 = vmatprep.subr.mxu0 0.0
    %235 = vmatpush1.msra.mxu0 %v139
    %236 = vmatprep.subr.mxu0 0.0
    %237 = vmatpush1.msra.mxu0 %v140
    %238 = vmatprep.subr.mxu0 0.0
    %239 = vmatpush1.msra.mxu0 %v141
    %240 = vmatprep.subr.mxu0 0.0
    %241 = vmatpush1.msra.mxu0 %v142
    %242 = vmatprep.subr.mxu0 0.0
    %243 = vmatpush1.msra.mxu0 %v143
    %244 = vmatprep.subr.mxu0 0.0
    %245 = vmatpush1.msra.mxu0 %v144
    %246 = vmatprep.subr.mxu0 0.0
    %247 = vmatpush1.msra.mxu0 %v145
    %248 = vmatprep.subr.mxu0 0.0
    %249 = vmatpush1.msra.mxu0 %v146
    %250 = vmatprep.subr.mxu0 0.0
    %251 = vmatpush1.msra.mxu0 %v147
    %252 = vmatprep.subr.mxu0 0.0
    %253 = vmatpush1.msra.mxu0 %v148
    %254 = vmatprep.subr.mxu0 0.0
    %255 = vmatpush1.msra.mxu0 %v149
    %256 = vmatprep.subr.mxu0 0.0
    %257 = vmatpush1.msra.mxu0 %v150
    %258 = vmatprep.subr.mxu0 0.0
    %259 = vmatpush1.msra.mxu0 %v151
    %260 = vmatprep.subr.mxu0 0.0
    %261 = vmatpush1.msra.mxu0 %v152
    %262 = vmatprep.subr.mxu0 0.0
    %263 = vmatpush1.msra.mxu0 %v153
    %264 = vmatprep.subr.mxu0 0.0
    %265 = vmatpush1.msra.mxu0 %v154
    %266 = vmatprep.subr.mxu0 0.0
    %267 = vmatpush1.msra.mxu0 0.0
    %268 = vmatprep.subr.mxu0 0.0
    %269 = vmatpush1.msra.mxu0 0.0
    %270 = vmatprep.subr.mxu0 0.0
    %271 = vmatpush1.msra.mxu0 0.0
    %272 = vmatprep.subr.mxu0 0.0
    %273 = vmatpush1.msra.mxu0 0.0
    %274 = vmatprep.subr.mxu0 0.0
    %275 = vmatpush1.msra.mxu0 0.0
    %276 = vmatprep.subr.mxu0 0.0
    %277 = vmatpush1.msra.mxu0 0.0
    %278 = vmatprep.subr.mxu0 0.0
    %279 = vmatpush1.msra.mxu0 0.0
    %280 = vmatprep.subr.mxu0 0.0
    %281 = vmatpush1.msra.mxu0 0.0
    %282 = vmatprep.subr.mxu0 0.0
    %283 = vmatpush1.msra.mxu0 0.0
    %284 = vmatprep.subr.mxu0 0.0
    %285 = vmatpush1.msra.mxu0 0.0
    %286 = vmatprep.subr.mxu0 0.0
    %287 = vmatpush1.msra.mxu0 0.0
    %288 = vmatprep.subr.mxu0 0.0
    %289 = vmatpush1.msra.mxu0 0.0
    %290 = vmatprep.subr.mxu0 0.0
    %291 = vmatpush1.msra.mxu0 0.0
    %292 = vmatprep.subr.mxu0 0.0
    %293 = vmatpush1.msra.mxu0 0.0
    %294 = vmatprep.subr.mxu0 0.0
    %295 = vmatpush1.msra.mxu0 0.0
    %296 = vmatprep.subr.mxu0 0.0
    %297 = vmatpush1.msra.mxu0 0.0
    %298 = vmatprep.mubr.f32.mxu0 0.0
    %299 = vmatmul.mubr.f32.gmra.mrb[0].mxu0 %v232
    %v300 = vpop.f32.mrb[0].mxu0
    %v301 = vadd.f32 1e-05, %v300
    %v302 = vpop.f32.mrb[0].mxu0
    %303 = vmatprep.mubr.f32.mxu0 0.0
    %304 = vmatmul.mubr.f32.gmra.mrb[0].mxu0 %v233
    %v305 = vpop.f32.mrb[0].mxu0
    %v306 = vadd.f32 1e-05, %v305
    %v307 = vpop.f32.mrb[0].mxu0
    %308 = vdwg.mxu0
    %v309 = vrsqrt.pop %v301
    %v310 = vrsqrt.pop %v306
    %v311 = vmul.f32 %v230, %v309
    %v312 = vmul.f32 %v231, %v310
    %v313 = vlaneseq
    %v314 = vshrl.u32 %v313, 7
    %v315 = vsub.s32 1, %v314
    %v316 = vrot.slane %v45, %v315
    %v317 = vmul.f32 %v311, %v316
    %v318 = vmul.f32 %v312, %v316
    %v319 = vlaneseq
    %v320 = vshrl.u32 %v319, 7
    %v321 = vsub.s32 2, %v320
    %v322 = vrot.slane %v45, %v321
    %v323 = vadd.f32 %v317, %v322
    %v324 = vadd.f32 %v318, %v322
    %v325 = vld [vmem:[#allocation2 + $0x98] sm:$0xff]
    %v326 = vld [vmem:[#allocation2 + $0xa0] sm:$0xff]
    %v327 = vld [vmem:[#allocation2 + $0xa8] sm:$0xff]
    %v328 = vld [vmem:[#allocation2 + $0xb0] sm:$0xff]
    %v329 = vld [vmem:[#allocation2 + $0xb8] sm:$0xff]
    %v330 = vld [vmem:[#allocation2 + $0xc0] sm:$0xff]
    %v331 = vld [vmem:[#allocation2 + $0xc8] sm:$0xff]
    %v332 = vld [vmem:[#allocation2 + $0xd0] sm:$0xff]
    %v333 = vld [vmem:[#allocation2 + $0xd8] sm:$0xff]
    %v334 = vld [vmem:[#allocation2 + $0xe0] sm:$0xff]
    %v335 = vld [vmem:[#allocation2 + $0xe8] sm:$0xff]
    %v336 = vld [vmem:[#allocation2 + $0xf0] sm:$0xff]
    %v337 = vld [vmem:[#allocation2 + $0xf8] sm:$0xff]
    %v338 = vld [vmem:[#allocation2 + $0x100] sm:$0xff]
    %v339 = vld [vmem:[#allocation2 + $0x108] sm:$0xff]
    %v340 = vld [vmem:[#allocation2 + $0x110] sm:$0xff]
    %v341 = vlaneseq
    %v342 = vshrl.u32 %v341, 7
    %v343 = vsub.s32 3, %v342
    %v344 = vrot.slane %v45, %v343
    %345 = vmatprep.subr.mxu0 0.0
    %346 = vmatpush1.msra.mxu0 %v325
    %347 = vmatprep.subr.mxu0 0.0
    %348 = vmatpush1.msra.mxu0 %v326
    %349 = vmatprep.subr.mxu0 0.0
    %350 = vmatpush1.msra.mxu0 %v327
    %351 = vmatprep.subr.mxu0 0.0
    %352 = vmatpush1.msra.mxu0 %v328
    %353 = vmatprep.subr.mxu0 0.0
    %354 = vmatpush1.msra.mxu0 %v329
    %355 = vmatprep.subr.mxu0 0.0
    %356 = vmatpush1.msra.mxu0 %v330
    %357 = vmatprep.subr.mxu0 0.0
    %358 = vmatpush1.msra.mxu0 %v331
    %359 = vmatprep.subr.mxu0 0.0
    %360 = vmatpush1.msra.mxu0 %v332
    %361 = vmatprep.subr.mxu0 0.0
    %362 = vmatpush1.msra.mxu0 %v333
    %363 = vmatprep.subr.mxu0 0.0
    %364 = vmatpush1.msra.mxu0 %v334
    %365 = vmatprep.subr.mxu0 0.0
    %366 = vmatpush1.msra.mxu0 %v335
    %367 = vmatprep.subr.mxu0 0.0
    %368 = vmatpush1.msra.mxu0 %v336
    %369 = vmatprep.subr.mxu0 0.0
    %370 = vmatpush1.msra.mxu0 %v337
    %371 = vmatprep.subr.mxu0 0.0
    %372 = vmatpush1.msra.mxu0 %v338
    %373 = vmatprep.subr.mxu0 0.0
    %374 = vmatpush1.msra.mxu0 %v339
    %375 = vmatprep.subr.mxu0 0.0
    %376 = vmatpush1.msra.mxu0 %v340
    %377 = vmatprep.subr.mxu0 0.0
    %378 = vmatpush1.msra.mxu0 0.0
    %379 = vmatprep.subr.mxu0 0.0
    %380 = vmatpush1.msra.mxu0 0.0
    %381 = vmatprep.subr.mxu0 0.0
    %382 = vmatpush1.msra.mxu0 0.0
    %383 = vmatprep.subr.mxu0 0.0
    %384 = vmatpush1.msra.mxu0 0.0
    %385 = vmatprep.subr.mxu0 0.0
    %386 = vmatpush1.msra.mxu0 0.0
    %387 = vmatprep.subr.mxu0 0.0
    %388 = vmatpush1.msra.mxu0 0.0
    %389 = vmatprep.subr.mxu0 0.0
    %390 = vmatpush1.msra.mxu0 0.0
    %391 = vmatprep.subr.mxu0 0.0
    %392 = vmatpush1.msra.mxu0 0.0
    %393 = vmatprep.subr.mxu0 0.0
    %394 = vmatpush1.msra.mxu0 0.0
    %395 = vmatprep.subr.mxu0 0.0
    %396 = vmatpush1.msra.mxu0 0.0
    %397 = vmatprep.subr.mxu0 0.0
    %398 = vmatpush1.msra.mxu0 0.0
    %399 = vmatprep.subr.mxu0 0.0
    %400 = vmatpush1.msra.mxu0 0.0
    %401 = vmatprep.subr.mxu0 0.0
    %402 = vmatpush1.msra.mxu0 0.0
    %403 = vmatprep.subr.mxu0 0.0
    %404 = vmatpush1.msra.mxu0 0.0
    %405 = vmatprep.subr.mxu0 0.0
    %406 = vmatpush1.msra.mxu0 0.0
    %407 = vmatprep.subr.mxu0 0.0
    %408 = vmatpush1.msra.mxu0 0.0
    %409 = vmatprep.mubr.f32.mxu0 0.0
    %410 = vmatmul.mubr.f32.gmra.mrb[0].mxu0 %v323
    %v411 = vpop.f32.mrb[0].mxu0
    %v412 = vadd.f32 %v344, %v411
    %v413 = vpop.f32.mrb[0].mxu0
    %414 = vmatprep.mubr.f32.mxu0 0.0
    %415 = vmatmul.mubr.f32.gmra.mrb[0].mxu0 %v324
    %v416 = vpop.f32.mrb[0].mxu0
    %v417 = vadd.f32 %v344, %v416
    %v418 = vpop.f32.mrb[0].mxu0
    %419 = vdwg.mxu0
    %v420 = vmul.f32 %v412, %v412
    %v421 = vmul.f32 %v417, %v417
    %v422 = vmul.f32 %v412, %v420
    %v423 = vmul.f32 %v417, %v421
    %v424 = vmul.f32 %v422, 0.044715
    %v425 = vmul.f32 %v423, 0.044715
    %v426 = vadd.f32 %v412, %v424
    %v427 = vadd.f32 %v417, %v425
    %v428 = vmul.f32 %v426, 0.7978846
    %v429 = vmul.f32 %v427, 0.7978846
    %v430 = vtanh.pop %v428
    %v431 = vtanh.pop %v429
    %v432 = vadd.f32 %v430, 1.0
    %v433 = vadd.f32 %v431, 1.0
    %v434 = vmul.f32 %v432, 0.5
    %v435 = vmul.f32 %v433, 0.5
    %v436 = vmul.f32 %v412, %v434
    %v437 = vmul.f32 %v417, %v435
    %v438 = vld [vmem:[#allocation2 + $0x118] sm:$0xff]
    %v439 = vld [vmem:[#allocation2 + $0x120] sm:$0xff]
    %v440 = vld [vmem:[#allocation2 + $0x128] sm:$0xff]
    %v441 = vld [vmem:[#allocation2 + $0x130] sm:$0xff]
    %v442 = vld [vmem:[#allocation2 + $0x138] sm:$0xff]
    %v443 = vld [vmem:[#allocation2 + $0x140] sm:$0xff]
    %v444 = vld [vmem:[#allocation2 + $0x148] sm:$0xff]
    %v445 = vld [vmem:[#allocation2 + $0x150] sm:$0xff]
    %v446 = vld [vmem:[#allocation2 + $0x158] sm:$0xff]
    %v447 = vld [vmem:[#allocation2 + $0x160] sm:$0xff]
    %v448 = vld [vmem:[#allocation2 + $0x168] sm:$0xff]
    %v449 = vld [vmem:[#allocation2 + $0x170] sm:$0xff]
    %v450 = vld [vmem:[#allocation2 + $0x178] sm:$0xff]
    %v451 = vld [vmem:[#allocation2 + $0x180] sm:$0xff]
    %v452 = vld [vmem:[#allocation2 + $0x188] sm:$0xff]
    %v453 = vld [vmem:[#allocation2 + $0x190] sm:$0xff]
    %v454 = vlaneseq
    %v455 = vshrl.u32 %v454, 7
    %v456 = vsub.s32 4, %v455
    %v457 = vrot.slane %v45, %v456
    %458 = vmatprep.subr.mxu0 0.0
    %459 = vmatpush1.msra.mxu0 %v438
    %460 = vmatprep.subr.mxu0 0.0
    %461 = vmatpush1.msra.mxu0 %v439
    %462 = vmatprep.subr.mxu0 0.0
    %463 = vmatpush1.msra.mxu0 %v440
    %464 = vmatprep.subr.mxu0 0.0
    %465 = vmatpush1.msra.mxu0 %v441
    %466 = vmatprep.subr.mxu0 0.0
    %467 = vmatpush1.msra.mxu0 %v442
    %468 = vmatprep.subr.mxu0 0.0
    %469 = vmatpush1.msra.mxu0 %v443
    %470 = vmatprep.subr.mxu0 0.0
    %471 = vmatpush1.msra.mxu0 %v444
    %472 = vmatprep.subr.mxu0 0.0
    %473 = vmatpush1.msra.mxu0 %v445
    %474 = vmatprep.subr.mxu0 0.0
    %475 = vmatpush1.msra.mxu0 %v446
    %476 = vmatprep.subr.mxu0 0.0
    %477 = vmatpush1.msra.mxu0 %v447
    %478 = vmatprep.subr.mxu0 0.0
    %479 = vmatpush1.msra.mxu0 %v448
    %480 = vmatprep.subr.mxu0 0.0
    %481 = vmatpush1.msra.mxu0 %v449
    %482 = vmatprep.subr.mxu0 0.0
    %483 = vmatpush1.msra.mxu0 %v450
    %484 = vmatprep.subr.mxu0 0.0
    %485 = vmatpush1.msra.mxu0 %v451
    %486 = vmatprep.subr.mxu0 0.0
    %487 = vmatpush1.msra.mxu0 %v452
    %488 = vmatprep.subr.mxu0 0.0
    %489 = vmatpush1.msra.mxu0 %v453
    %490 = vmatprep.subr.mxu0 0.0
    %491 = vmatpush1.msra.mxu0 0.0
    %492 = vmatprep.subr.mxu0 0.0
    %493 = vmatpush1.msra.mxu0 0.0
    %494 = vmatprep.subr.mxu0 0.0
    %495 = vmatpush1.msra.mxu0 0.0
    %496 = vmatprep.subr.mxu0 0.0
    %497 = vmatpush1.msra.mxu0 0.0
    %498 = vmatprep.subr.mxu0 0.0
    %499 = vmatpush1.msra.mxu0 0.0
    %500 = vmatprep.subr.mxu0 0.0
    %501 = vmatpush1.msra.mxu0 0.0
    %502 = vmatprep.subr.mxu0 0.0
    %503 = vmatpush1.msra.mxu0 0.0
    %504 = vmatprep.subr.mxu0 0.0
    %505 = vmatpush1.msra.mxu0 0.0
    %506 = vmatprep.subr.mxu0 0.0
    %507 = vmatpush1.msra.mxu0 0.0
    %508 = vmatprep.subr.mxu0 0.0
    %509 = vmatpush1.msra.mxu0 0.0
    %510 = vmatprep.subr.mxu0 0.0
    %511 = vmatpush1.msra.mxu0 0.0
    %512 = vmatprep.subr.mxu0 0.0
    %513 = vmatpush1.msra.mxu0 0.0
    %514 = vmatprep.subr.mxu0 0.0
    %515 = vmatpush1.msra.mxu0 0.0
    %516 = vmatprep.subr.mxu0 0.0
    %517 = vmatpush1.msra.mxu0 0.0
    %518 = vmatprep.subr.mxu0 0.0
    %519 = vmatpush1.msra.mxu0 0.0
    %520 = vmatprep.subr.mxu0 0.0
    %521 = vmatpush1.msra.mxu0 0.0
    %522 = vmatprep.mubr.f32.mxu0 0.0
    %523 = vmatmul.mubr.f32.gmra.mrb[0].mxu0 %v323
    %v524 = vpop.f32.mrb[0].mxu0
    %v525 = vadd.f32 %v457, %v524
    %v526 = vpop.f32.mrb[0].mxu0
    %527 = vmatprep.mubr.f32.mxu0 0.0
    %528 = vmatmul.mubr.f32.gmra.mrb[0].mxu0 %v324
    %v529 = vpop.f32.mrb[0].mxu0
    %v530 = vadd.f32 %v457, %v529
    %v531 = vpop.f32.mrb[0].mxu0
    %532 = vdwg.mxu0
    %v533 = vmul.f32 %v525, %v525
    %v534 = vmul.f32 %v530, %v530
    %v535 = vmul.f32 %v525, %v533
    %v536 = vmul.f32 %v530, %v534
    %v537 = vmul.f32 %v535, 0.044715
    %v538 = vmul.f32 %v536, 0.044715
    %v539 = vadd.f32 %v525, %v537
    %v540 = vadd.f32 %v530, %v538
    %v541 = vmul.f32 %v539, 0.7978846
    %v542 = vmul.f32 %v540, 0.7978846
    %v543 = vtanh.pop %v541
    %v544 = vtanh.pop %v542
    %v545 = vadd.f32 %v543, 1.0
    %v546 = vadd.f32 %v544, 1.0
    %v547 = vmul.f32 %v545, 0.5
    %v548 = vmul.f32 %v546, 0.5
    %v549 = vmul.f32 %v525, %v547
    %v550 = vmul.f32 %v530, %v548
    %v551 = vld [vmem:[#allocation2 + $0x198] sm:$0xff]
    %v552 = vld [vmem:[#allocation2 + $0x1a0] sm:$0xff]
    %v553 = vld [vmem:[#allocation2 + $0x1a8] sm:$0xff]
    %v554 = vld [vmem:[#allocation2 + $0x1b0] sm:$0xff]
    %v555 = vld [vmem:[#allocation2 + $0x1b8] sm:$0xff]
    %v556 = vld [vmem:[#allocation2 + $0x1c0] sm:$0xff]
    %v557 = vld [vmem:[#allocation2 + $0x1c8] sm:$0xff]
    %v558 = vld [vmem:[#allocation2 + $0x1d0] sm:$0xff]
    %v559 = vld [vmem:[#allocation2 + $0x1d8] sm:$0xff]
    %v560 = vld [vmem:[#allocation2 + $0x1e0] sm:$0xff]
    %v561 = vld [vmem:[#allocation2 + $0x1e8] sm:$0xff]
    %v562 = vld [vmem:[#allocation2 + $0x1f0] sm:$0xff]
    %v563 = vld [vmem:[#allocation2 + $0x1f8] sm:$0xff]
    %v564 = vld [vmem:[#allocation2 + $0x200] sm:$0xff]
    %v565 = vld [vmem:[#allocation2 + $0x208] sm:$0xff]
    %v566 = vld [vmem:[#allocation2 + $0x210] sm:$0xff]
    %567 = vmatprep.subr.mxu0 0.0
    %568 = vmatpush1.msra.mxu0 %v551
    %569 = vmatprep.subr.mxu0 0.0
    %570 = vmatpush1.msra.mxu0 %v552
    %571 = vmatprep.subr.mxu0 0.0
    %572 = vmatpush1.msra.mxu0 %v553
    %573 = vmatprep.subr.mxu0 0.0
    %574 = vmatpush1.msra.mxu0 %v554
    %575 = vmatprep.subr.mxu0 0.0
    %576 = vmatpush1.msra.mxu0 %v555
    %577 = vmatprep.subr.mxu0 0.0
    %578 = vmatpush1.msra.mxu0 %v556
    %579 = vmatprep.subr.mxu0 0.0
    %580 = vmatpush1.msra.mxu0 %v557
    %581 = vmatprep.subr.mxu0 0.0
    %582 = vmatpush1.msra.mxu0 %v558
    %583 = vmatprep.subr.mxu0 0.0
    %584 = vmatpush1.msra.mxu0 %v559
    %585 = vmatprep.subr.mxu0 0.0
    %586 = vmatpush1.msra.mxu0 %v560
    %587 = vmatprep.subr.mxu0 0.0
    %588 = vmatpush1.msra.mxu0 %v561
    %589 = vmatprep.subr.mxu0 0.0
    %590 = vmatpush1.msra.mxu0 %v562
    %591 = vmatprep.subr.mxu0 0.0
    %592 = vmatpush1.msra.mxu0 %v563
    %593 = vmatprep.subr.mxu0 0.0
    %594 = vmatpush1.msra.mxu0 %v564
    %595 = vmatprep.subr.mxu0 0.0
    %596 = vmatpush1.msra.mxu0 %v565
    %597 = vmatprep.subr.mxu0 0.0
    %598 = vmatpush1.msra.mxu0 %v566
    %599 = vmatprep.subr.mxu0 0.0
    %600 = vmatpush1.msra.mxu0 0.0
    %601 = vmatprep.subr.mxu0 0.0
    %602 = vmatpush1.msra.mxu0 0.0
    %603 = vmatprep.subr.mxu0 0.0
    %604 = vmatpush1.msra.mxu0 0.0
    %605 = vmatprep.subr.mxu0 0.0
    %606 = vmatpush1.msra.mxu0 0.0
    %607 = vmatprep.subr.mxu0 0.0
    %608 = vmatpush1.msra.mxu0 0.0
    %609 = vmatprep.subr.mxu0 0.0
    %610 = vmatpush1.msra.mxu0 0.0
    %611 = vmatprep.subr.mxu0 0.0
    %612 = vmatpush1.msra.mxu0 0.0
    %613 = vmatprep.subr.mxu0 0.0
    %614 = vmatpush1.msra.mxu0 0.0
    %615 = vmatprep.subr.mxu0 0.0
    %616 = vmatpush1.msra.mxu0 0.0
    %617 = vmatprep.subr.mxu0 0.0
    %618 = vmatpush1.msra.mxu0 0.0
    %619 = vmatprep.subr.mxu0 0.0
    %620 = vmatpush1.msra.mxu0 0.0
    %621 = vmatprep.subr.mxu0 0.0
    %622 = vmatpush1.msra.mxu0 0.0
    %623 = vmatprep.subr.mxu0 0.0
    %624 = vmatpush1.msra.mxu0 0.0
    %625 = vmatprep.subr.mxu0 0.0
    %626 = vmatpush1.msra.mxu0 0.0
    %627 = vmatprep.subr.mxu0 0.0
    %628 = vmatpush1.msra.mxu0 0.0
    %629 = vmatprep.subr.mxu0 0.0
    %630 = vmatpush1.msra.mxu0 0.0
    %631 = vmatprep.mubr.f32.mxu0 0.0
    %632 = vmatmul.mubr.f32.gmra.mrb[0].mxu0 %v549
    %v633 = vpop.f32.mrb[0].mxu0
    %v634 = vadd.f32 0.0, %v633
    %v635 = vpop.f32.mrb[0].mxu0
    %636 = vmatprep.mubr.f32.mxu0 0.0
    %637 = vmatmul.mubr.f32.gmra.mrb[0].mxu0 %v550
    %v638 = vpop.f32.mrb[0].mxu0
    %v639 = vadd.f32 0.0, %v638
    %v640 = vpop.f32.mrb[0].mxu0
    %641 = vdwg.mxu0
    %v642 = vsub.f32 %v549, %v634
    %v643 = vsub.f32 %v550, %v639
    %v644 = vmul.f32 %v642, %v642
    %v645 = vmul.f32 %v643, %v643
    %646 = vmatprep.subr.mxu0 0.0
    %647 = vmatpush1.msra.mxu0 %v551
    %648 = vmatprep.subr.mxu0 0.0
    %649 = vmatpush1.msra.mxu0 %v552
    %650 = vmatprep.subr.mxu0 0.0
    %651 = vmatpush1.msra.mxu0 %v553
    %652 = vmatprep.subr.mxu0 0.0
    %653 = vmatpush1.msra.mxu0 %v554
    %654 = vmatprep.subr.mxu0 0.0
    %655 = vmatpush1.msra.mxu0 %v555
    %656 = vmatprep.subr.mxu0 0.0
    %657 = vmatpush1.msra.mxu0 %v556
    %658 = vmatprep.subr.mxu0 0.0
    %659 = vmatpush1.msra.mxu0 %v557
    %660 = vmatprep.subr.mxu0 0.0
    %661 = vmatpush1.msra.mxu0 %v558
    %662 = vmatprep.subr.mxu0 0.0
    %663 = vmatpush1.msra.mxu0 %v559
    %664 = vmatprep.subr.mxu0 0.0
    %665 = vmatpush1.msra.mxu0 %v560
    %666 = vmatprep.subr.mxu0 0.0
    %667 = vmatpush1.msra.mxu0 %v561
    %668 = vmatprep.subr.mxu0 0.0
    %669 = vmatpush1.msra.mxu0 %v562
    %670 = vmatprep.subr.mxu0 0.0
    %671 = vmatpush1.msra.mxu0 %v563
    %672 = vmatprep.subr.mxu0 0.0
    %673 = vmatpush1.msra.mxu0 %v564
    %674 = vmatprep.subr.mxu0 0.0
    %675 = vmatpush1.msra.mxu0 %v565
    %676 = vmatprep.subr.mxu0 0.0
    %677 = vmatpush1.msra.mxu0 %v566
    %678 = vmatprep.subr.mxu0 0.0
    %679 = vmatpush1.msra.mxu0 0.0
    %680 = vmatprep.subr.mxu0 0.0
    %681 = vmatpush1.msra.mxu0 0.0
    %682 = vmatprep.subr.mxu0 0.0
    %683 = vmatpush1.msra.mxu0 0.0
    %684 = vmatprep.subr.mxu0 0.0
    %685 = vmatpush1.msra.mxu0 0.0
    %686 = vmatprep.subr.mxu0 0.0
    %687 = vmatpush1.msra.mxu0 0.0
    %688 = vmatprep.subr.mxu0 0.0
    %689 = vmatpush1.msra.mxu0 0.0
    %690 = vmatprep.subr.mxu0 0.0
    %691 = vmatpush1.msra.mxu0 0.0
    %692 = vmatprep.subr.mxu0 0.0
    %693 = vmatpush1.msra.mxu0 0.0
    %694 = vmatprep.subr.mxu0 0.0
    %695 = vmatpush1.msra.mxu0 0.0
    %696 = vmatprep.subr.mxu0 0.0
    %697 = vmatpush1.msra.mxu0 0.0
    %698 = vmatprep.subr.mxu0 0.0
    %699 = vmatpush1.msra.mxu0 0.0
    %700 = vmatprep.subr.mxu0 0.0
    %701 = vmatpush1.msra.mxu0 0.0
    %702 = vmatprep.subr.mxu0 0.0
    %703 = vmatpush1.msra.mxu0 0.0
    %704 = vmatprep.subr.mxu0 0.0
    %705 = vmatpush1.msra.mxu0 0.0
    %706 = vmatprep.subr.mxu0 0.0
    %707 = vmatpush1.msra.mxu0 0.0
    %708 = vmatprep.subr.mxu0 0.0
    %709 = vmatpush1.msra.mxu0 0.0
    %710 = vmatprep.mubr.f32.mxu0 0.0
    %711 = vmatmul.mubr.f32.gmra.mrb[0].mxu0 %v644
    %v712 = vpop.f32.mrb[0].mxu0
    %v713 = vadd.f32 1e-05, %v712
    %v714 = vpop.f32.mrb[0].mxu0
    %715 = vmatprep.mubr.f32.mxu0 0.0
    %716 = vmatmul.mubr.f32.gmra.mrb[0].mxu0 %v645
    %v717 = vpop.f32.mrb[0].mxu0
    %v718 = vadd.f32 1e-05, %v717
    %v719 = vpop.f32.mrb[0].mxu0
    %720 = vdwg.mxu0
    %v721 = vrsqrt.pop %v713
    %v722 = vrsqrt.pop %v718
    %v723 = vmul.f32 %v642, %v721
    %v724 = vmul.f32 %v643, %v722
    %v725 = vlaneseq
    %v726 = vshrl.u32 %v725, 7
    %v727 = vsub.s32 5, %v726
    %v728 = vrot.slane %v45, %v727
    %v729 = vmul.f32 %v723, %v728
    %v730 = vmul.f32 %v724, %v728
    %v731 = vlaneseq
    %v732 = vshrl.u32 %v731, 7
    %v733 = vsub.s32 6, %v732
    %v734 = vrot.slane %v45, %v733
    %v735 = vadd.f32 %v729, %v734
    %v736 = vadd.f32 %v730, %v734
    %v737 = vld [vmem:[#allocation2 + $0x218] sm:$0xff]
    %v738 = vld [vmem:[#allocation2 + $0x220] sm:$0xff]
    %v739 = vld [vmem:[#allocation2 + $0x228] sm:$0xff]
    %v740 = vld [vmem:[#allocation2 + $0x230] sm:$0xff]
    %v741 = vld [vmem:[#allocation2 + $0x238] sm:$0xff]
    %v742 = vld [vmem:[#allocation2 + $0x240] sm:$0xff]
    %v743 = vld [vmem:[#allocation2 + $0x248] sm:$0xff]
    %v744 = vld [vmem:[#allocation2 + $0x250] sm:$0xff]
    %v745 = vld [vmem:[#allocation2 + $0x258] sm:$0xff]
    %v746 = vld [vmem:[#allocation2 + $0x260] sm:$0xff]
    %v747 = vld [vmem:[#allocation2 + $0x268] sm:$0xff]
    %v748 = vld [vmem:[#allocation2 + $0x270] sm:$0xff]
    %v749 = vld [vmem:[#allocation2 + $0x278] sm:$0xff]
    %v750 = vld [vmem:[#allocation2 + $0x280] sm:$0xff]
    %v751 = vld [vmem:[#allocation2 + $0x288] sm:$0xff]
    %v752 = vld [vmem:[#allocation2 + $0x290] sm:$0xff]
    %v753 = vlaneseq
    %v754 = vshrl.u32 %v753, 7
    %v755 = vsub.s32 7, %v754
    %v756 = vrot.slane %v45, %v755
    %757 = vmatprep.subr.mxu0 0.0
    %758 = vmatpush1.msra.mxu0 %v737
    %759 = vmatprep.subr.mxu0 0.0
    %760 = vmatpush1.msra.mxu0 %v738
    %761 = vmatprep.subr.mxu0 0.0
    %762 = vmatpush1.msra.mxu0 %v739
    %763 = vmatprep.subr.mxu0 0.0
    %764 = vmatpush1.msra.mxu0 %v740
    %765 = vmatprep.subr.mxu0 0.0
    %766 = vmatpush1.msra.mxu0 %v741
    %767 = vmatprep.subr.mxu0 0.0
    %768 = vmatpush1.msra.mxu0 %v742
    %769 = vmatprep.subr.mxu0 0.0
    %770 = vmatpush1.msra.mxu0 %v743
    %771 = vmatprep.subr.mxu0 0.0
    %772 = vmatpush1.msra.mxu0 %v744
    %773 = vmatprep.subr.mxu0 0.0
    %774 = vmatpush1.msra.mxu0 %v745
    %775 = vmatprep.subr.mxu0 0.0
    %776 = vmatpush1.msra.mxu0 %v746
    %777 = vmatprep.subr.mxu0 0.0
    %778 = vmatpush1.msra.mxu0 %v747
    %779 = vmatprep.subr.mxu0 0.0
    %780 = vmatpush1.msra.mxu0 %v748
    %781 = vmatprep.subr.mxu0 0.0
    %782 = vmatpush1.msra.mxu0 %v749
    %783 = vmatprep.subr.mxu0 0.0
    %784 = vmatpush1.msra.mxu0 %v750
    %785 = vmatprep.subr.mxu0 0.0
    %786 = vmatpush1.msra.mxu0 %v751
    %787 = vmatprep.subr.mxu0 0.0
    %788 = vmatpush1.msra.mxu0 %v752
    %789 = vmatprep.subr.mxu0 0.0
    %790 = vmatpush1.msra.mxu0 0.0
    %791 = vmatprep.subr.mxu0 0.0
    %792 = vmatpush1.msra.mxu0 0.0
    %793 = vmatprep.subr.mxu0 0.0
    %794 = vmatpush1.msra.mxu0 0.0
    %795 = vmatprep.subr.mxu0 0.0
    %796 = vmatpush1.msra.mxu0 0.0
    %797 = vmatprep.subr.mxu0 0.0
    %798 = vmatpush1.msra.mxu0 0.0
    %799 = vmatprep.subr.mxu0 0.0
    %800 = vmatpush1.msra.mxu0 0.0
    %801 = vmatprep.subr.mxu0 0.0
    %802 = vmatpush1.msra.mxu0 0.0
    %803 = vmatprep.subr.mxu0 0.0
    %804 = vmatpush1.msra.mxu0 0.0
    %805 = vmatprep.subr.mxu0 0.0
    %806 = vmatpush1.msra.mxu0 0.0
    %807 = vmatprep.subr.mxu0 0.0
    %808 = vmatpush1.msra.mxu0 0.0
    %809 = vmatprep.subr.mxu0 0.0
    %810 = vmatpush1.msra.mxu0 0.0
    %811 = vmatprep.subr.mxu0 0.0
    %812 = vmatpush1.msra.mxu0 0.0
    %813 = vmatprep.subr.mxu0 0.0
    %814 = vmatpush1.msra.mxu0 0.0
    %815 = vmatprep.subr.mxu0 0.0
    %816 = vmatpush1.msra.mxu0 0.0
    %817 = vmatprep.subr.mxu0 0.0
    %818 = vmatpush1.msra.mxu0 0.0
    %819 = vmatprep.subr.mxu0 0.0
    %820 = vmatpush1.msra.mxu0 0.0
    %821 = vmatprep.mubr.f32.mxu0 0.0
    %822 = vmatmul.mubr.f32.gmra.mrb[0].mxu0 %v735
    %v823 = vpop.f32.mrb[0].mxu0
    %v824 = vadd.f32 %v756, %v823
    %v825 = vpop.f32.mrb[0].mxu0
    %826 = vmatprep.mubr.f32.mxu0 0.0
    %827 = vmatmul.mubr.f32.gmra.mrb[0].mxu0 %v736
    %v828 = vpop.f32.mrb[0].mxu0
    %v829 = vadd.f32 %v756, %v828
    %v830 = vpop.f32.mrb[0].mxu0
    %831 = vdwg.mxu0
    %v832 = vmul.f32 %v436, %v824
    %v833 = vmul.f32 %v437, %v829
    %v834 = vld [vmem:[#allocation2 + $0x298] sm:$0xff]
    %v835 = vld [vmem:[#allocation2 + $0x2a0] sm:$0xff]
    %v836 = vld [vmem:[#allocation2 + $0x2a8] sm:$0xff]
    %v837 = vld [vmem:[#allocation2 + $0x2b0] sm:$0xff]
    %v838 = vld [vmem:[#allocation2 + $0x2b8] sm:$0xff]
    %v839 = vld [vmem:[#allocation2 + $0x2c0] sm:$0xff]
    %v840 = vld [vmem:[#allocation2 + $0x2c8] sm:$0xff]
    %v841 = vld [vmem:[#allocation2 + $0x2d0] sm:$0xff]
    %v842 = vld [vmem:[#allocation2 + $0x2d8] sm:$0xff]
    %v843 = vld [vmem:[#allocation2 + $0x2e0] sm:$0xff]
    %v844 = vld [vmem:[#allocation2 + $0x2e8] sm:$0xff]
    %v845 = vld [vmem:[#allocation2 + $0x2f0] sm:$0xff]
    %v846 = vld [vmem:[#allocation2 + $0x2f8] sm:$0xff]
    %v847 = vld [vmem:[#allocation2 + $0x300] sm:$0xff]
    %v848 = vld [vmem:[#allocation2 + $0x308] sm:$0xff]
    %v849 = vld [vmem:[#allocation2 + $0x310] sm:$0xff]
    %850 = vmatprep.subr.mxu0 0.0
    %851 = vmatpush1.msra.mxu0 %v834
    %852 = vmatprep.subr.mxu0 0.0
    %853 = vmatpush1.msra.mxu0 %v835
    %854 = vmatprep.subr.mxu0 0.0
    %855 = vmatpush1.msra.mxu0 %v836
    %856 = vmatprep.subr.mxu0 0.0
    %857 = vmatpush1.msra.mxu0 %v837
    %858 = vmatprep.subr.mxu0 0.0
    %859 = vmatpush1.msra.mxu0 %v838
    %860 = vmatprep.subr.mxu0 0.0
    %861 = vmatpush1.msra.mxu0 %v839
    %862 = vmatprep.subr.mxu0 0.0
    %863 = vmatpush1.msra.mxu0 %v840
    %864 = vmatprep.subr.mxu0 0.0
    %865 = vmatpush1.msra.mxu0 %v841
    %866 = vmatprep.subr.mxu0 0.0
    %867 = vmatpush1.msra.mxu0 %v842
    %868 = vmatprep.subr.mxu0 0.0
    %869 = vmatpush1.msra.mxu0 %v843
    %870 = vmatprep.subr.mxu0 0.0
    %871 = vmatpush1.msra.mxu0 %v844
    %872 = vmatprep.subr.mxu0 0.0
    %873 = vmatpush1.msra.mxu0 %v845
    %874 = vmatprep.subr.mxu0 0.0
    %875 = vmatpush1.msra.mxu0 %v846
    %876 = vmatprep.subr.mxu0 0.0
    %877 = vmatpush1.msra.mxu0 %v847
    %878 = vmatprep.subr.mxu0 0.0
    %879 = vmatpush1.msra.mxu0 %v848
    %880 = vmatprep.subr.mxu0 0.0
    %881 = vmatpush1.msra.mxu0 %v849
    %882 = vmatprep.subr.mxu0 0.0
    %883 = vmatpush1.msra.mxu0 0.0
    %884 = vmatprep.subr.mxu0 0.0
    %885 = vmatpush1.msra.mxu0 0.0
    %886 = vmatprep.subr.mxu0 0.0
    %887 = vmatpush1.msra.mxu0 0.0
    %888 = vmatprep.subr.mxu0 0.0
    %889 = vmatpush1.msra.mxu0 0.0
    %890 = vmatprep.subr.mxu0 0.0
    %891 = vmatpush1.msra.mxu0 0.0
    %892 = vmatprep.subr.mxu0 0.0
    %893 = vmatpush1.msra.mxu0 0.0
    %894 = vmatprep.subr.mxu0 0.0
    %895 = vmatpush1.msra.mxu0 0.0
    %896 = vmatprep.subr.mxu0 0.0
    %897 = vmatpush1.msra.mxu0 0.0
    %898 = vmatprep.subr.mxu0 0.0
    %899 = vmatpush1.msra.mxu0 0.0
    %900 = vmatprep.subr.mxu0 0.0
    %901 = vmatpush1.msra.mxu0 0.0
    %902 = vmatprep.subr.mxu0 0.0
    %903 = vmatpush1.msra.mxu0 0.0
    %904 = vmatprep.subr.mxu0 0.0
    %905 = vmatpush1.msra.mxu0 0.0
    %906 = vmatprep.subr.mxu0 0.0
    %907 = vmatpush1.msra.mxu0 0.0
    %908 = vmatprep.subr.mxu0 0.0
    %909 = vmatpush1.msra.mxu0 0.0
    %910 = vmatprep.subr.mxu0 0.0
    %911 = vmatpush1.msra.mxu0 0.0
    %912 = vmatprep.subr.mxu0 0.0
    %913 = vmatpush1.msra.mxu0 0.0
    %914 = vmatprep.mubr.f32.mxu0 0.0
    %915 = vmatmul.mubr.f32.gmra.mrb[0].mxu0 %v832
    %v916 = vpop.f32.mrb[0].mxu0
    %v917 = vadd.f32 0.0, %v916
    %v918 = vpop.f32.mrb[0].mxu0
    %919 = vmatprep.mubr.f32.mxu0 0.0
    %920 = vmatmul.mubr.f32.gmra.mrb[0].mxu0 %v833
    %v921 = vpop.f32.mrb[0].mxu0
    %v922 = vadd.f32 0.0, %v921
    %v923 = vpop.f32.mrb[0].mxu0
    %924 = vdwg.mxu0
    %v925 = vadd.f32 %v131, %v917
    %v926 = vadd.f32 %v136, %v922
    %v927 = vlaneseq
    %v928 = vshrl.u32 %v927, 7
    %v929 = vsub.s32 0, %v928
    %v930 = vrot.slane %v46, %v929
    %v931 = vadd.f32 %v925, %v930
    %v932 = vadd.f32 %v926, %v930
    %933 = vmatprep.subr.mxu0 0.0
    %934 = vmatpush1.msra.mxu0 %v139
    %935 = vmatprep.subr.mxu0 0.0
    %936 = vmatpush1.msra.mxu0 %v140
    %937 = vmatprep.subr.mxu0 0.0
    %938 = vmatpush1.msra.mxu0 %v141
    %939 = vmatprep.subr.mxu0 0.0
    %940 = vmatpush1.msra.mxu0 %v142
    %941 = vmatprep.subr.mxu0 0.0
    %942 = vmatpush1.msra.mxu0 %v143
    %943 = vmatprep.subr.mxu0 0.0
    %944 = vmatpush1.msra.mxu0 %v144
    %945 = vmatprep.subr.mxu0 0.0
    %946 = vmatpush1.msra.mxu0 %v145
    %947 = vmatprep.subr.mxu0 0.0
    %948 = vmatpush1.msra.mxu0 %v146
    %949 = vmatprep.subr.mxu0 0.0
    %950 = vmatpush1.msra.mxu0 %v147
    %951 = vmatprep.subr.mxu0 0.0
    %952 = vmatpush1.msra.mxu0 %v148
    %953 = vmatprep.subr.mxu0 0.0
    %954 = vmatpush1.msra.mxu0 %v149
    %955 = vmatprep.subr.mxu0 0.0
    %956 = vmatpush1.msra.mxu0 %v150
    %957 = vmatprep.subr.mxu0 0.0
    %958 = vmatpush1.msra.mxu0 %v151
    %959 = vmatprep.subr.mxu0 0.0
    %960 = vmatpush1.msra.mxu0 %v152
    %961 = vmatprep.subr.mxu0 0.0
    %962 = vmatpush1.msra.mxu0 %v153
    %963 = vmatprep.subr.mxu0 0.0
    %964 = vmatpush1.msra.mxu0 %v154
    %965 = vmatprep.subr.mxu0 0.0
    %966 = vmatpush1.msra.mxu0 0.0
    %967 = vmatprep.subr.mxu0 0.0
    %968 = vmatpush1.msra.mxu0 0.0
    %969 = vmatprep.subr.mxu0 0.0
    %970 = vmatpush1.msra.mxu0 0.0
    %971 = vmatprep.subr.mxu0 0.0
    %972 = vmatpush1.msra.mxu0 0.0
    %973 = vmatprep.subr.mxu0 0.0
    %974 = vmatpush1.msra.mxu0 0.0
    %975 = vmatprep.subr.mxu0 0.0
    %976 = vmatpush1.msra.mxu0 0.0
    %977 = vmatprep.subr.mxu0 0.0
    %978 = vmatpush1.msra.mxu0 0.0
    %979 = vmatprep.subr.mxu0 0.0
    %980 = vmatpush1.msra.mxu0 0.0
    %981 = vmatprep.subr.mxu0 0.0
    %982 = vmatpush1.msra.mxu0 0.0
    %983 = vmatprep.subr.mxu0 0.0
    %984 = vmatpush1.msra.mxu0 0.0
    %985 = vmatprep.subr.mxu0 0.0
    %986 = vmatpush1.msra.mxu0 0.0
    %987 = vmatprep.subr.mxu0 0.0
    %988 = vmatpush1.msra.mxu0 0.0
    %989 = vmatprep.subr.mxu0 0.0
    %990 = vmatpush1.msra.mxu0 0.0
    %991 = vmatprep.subr.mxu0 0.0
    %992 = vmatpush1.msra.mxu0 0.0
    %993 = vmatprep.subr.mxu0 0.0
    %994 = vmatpush1.msra.mxu0 0.0
    %995 = vmatprep.subr.mxu0 0.0
    %996 = vmatpush1.msra.mxu0 0.0
    %997 = vmatprep.mubr.f32.mxu0 0.0
    %998 = vmatmul.mubr.f32.gmra.mrb[0].mxu0 %v931
    %v999 = vpop.f32.mrb[0].mxu0
    %v1000 = vadd.f32 0.0, %v999
    %v1001 = vpop.f32.mrb[0].mxu0
    %1002 = vmatprep.mubr.f32.mxu0 0.0
    %1003 = vmatmul.mubr.f32.gmra.mrb[0].mxu0 %v932
    %v1004 = vpop.f32.mrb[0].mxu0
    %v1005 = vadd.f32 0.0, %v1004
    %v1006 = vpop.f32.mrb[0].mxu0
    %1007 = vdwg.mxu0
    %v1008 = vsub.f32 %v931, %v1000
    %v1009 = vsub.f32 %v932, %v1005
    %v1010 = vmul.f32 %v1008, %v1008
    %v1011 = vmul.f32 %v1009, %v1009
    %1012 = vmatprep.subr.mxu0 0.0
    %1013 = vmatpush1.msra.mxu0 %v139
    %1014 = vmatprep.subr.mxu0 0.0
    %1015 = vmatpush1.msra.mxu0 %v140
    %1016 = vmatprep.subr.mxu0 0.0
    %1017 = vmatpush1.msra.mxu0 %v141
    %1018 = vmatprep.subr.mxu0 0.0
    %1019 = vmatpush1.msra.mxu0 %v142
    %1020 = vmatprep.subr.mxu0 0.0
    %1021 = vmatpush1.msra.mxu0 %v143
    %1022 = vmatprep.subr.mxu0 0.0
    %1023 = vmatpush1.msra.mxu0 %v144
    %1024 = vmatprep.subr.mxu0 0.0
    %1025 = vmatpush1.msra.mxu0 %v145
    %1026 = vmatprep.subr.mxu0 0.0
    %1027 = vmatpush1.msra.mxu0 %v146
    %1028 = vmatprep.subr.mxu0 0.0
    %1029 = vmatpush1.msra.mxu0 %v147
    %1030 = vmatprep.subr.mxu0 0.0
    %1031 = vmatpush1.msra.mxu0 %v148
    %1032 = vmatprep.subr.mxu0 0.0
    %1033 = vmatpush1.msra.mxu0 %v149
    %1034 = vmatprep.subr.mxu0 0.0
    %1035 = vmatpush1.msra.mxu0 %v150
    %1036 = vmatprep.subr.mxu0 0.0
    %1037 = vmatpush1.msra.mxu0 %v151
    %1038 = vmatprep.subr.mxu0 0.0
    %1039 = vmatpush1.msra.mxu0 %v152
    %1040 = vmatprep.subr.mxu0 0.0
    %1041 = vmatpush1.msra.mxu0 %v153
    %1042 = vmatprep.subr.mxu0 0.0
    %1043 = vmatpush1.msra.mxu0 %v154
    %1044 = vmatprep.subr.mxu0 0.0
    %1045 = vmatpush1.msra.mxu0 0.0
    %1046 = vmatprep.subr.mxu0 0.0
    %1047 = vmatpush1.msra.mxu0 0.0
    %1048 = vmatprep.subr.mxu0 0.0
    %1049 = vmatpush1.msra.mxu0 0.0
    %1050 = vmatprep.subr.mxu0 0.0
    %1051 = vmatpush1.msra.mxu0 0.0
    %1052 = vmatprep.subr.mxu0 0.0
    %1053 = vmatpush1.msra.mxu0 0.0
    %1054 = vmatprep.subr.mxu0 0.0
    %1055 = vmatpush1.msra.mxu0 0.0
    %1056 = vmatprep.subr.mxu0 0.0
    %1057 = vmatpush1.msra.mxu0 0.0
    %1058 = vmatprep.subr.mxu0 0.0
    %1059 = vmatpush1.msra.mxu0 0.0
    %1060 = vmatprep.subr.mxu0 0.0
    %1061 = vmatpush1.msra.mxu0 0.0
    %1062 = vmatprep.subr.mxu0 0.0
    %1063 = vmatpush1.msra.mxu0 0.0
    %1064 = vmatprep.subr.mxu0 0.0
    %1065 = vmatpush1.msra.mxu0 0.0
    %1066 = vmatprep.subr.mxu0 0.0
    %1067 = vmatpush1.msra.mxu0 0.0
    %1068 = vmatprep.subr.mxu0 0.0
    %1069 = vmatpush1.msra.mxu0 0.0
    %1070 = vmatprep.subr.mxu0 0.0
    %1071 = vmatpush1.msra.mxu0 0.0
    %1072 = vmatprep.subr.mxu0 0.0
    %1073 = vmatpush1.msra.mxu0 0.0
    %1074 = vmatprep.subr.mxu0 0.0
    %1075 = vmatpush1.msra.mxu0 0.0
    %1076 = vmatprep.mubr.f32.mxu0 0.0
    %1077 = vmatmul.mubr.f32.gmra.mrb[0].mxu0 %v1010
    %v1078 = vpop.f32.mrb[0].mxu0
    %v1079 = vadd.f32 1e-05, %v1078
    %v1080 = vpop.f32.mrb[0].mxu0
    %1081 = vmatprep.mubr.f32.mxu0 0.0
    %1082 = vmatmul.mubr.f32.gmra.mrb[0].mxu0 %v1011
    %v1083 = vpop.f32.mrb[0].mxu0
    %v1084 = vadd.f32 1e-05, %v1083
    %v1085 = vpop.f32.mrb[0].mxu0
    %1086 = vdwg.mxu0
    %v1087 = vrsqrt.pop %v1079
    %v1088 = vrsqrt.pop %v1084
    %v1089 = vmul.f32 %v1008, %v1087
    %v1090 = vmul.f32 %v1009, %v1088
    %v1091 = vlaneseq
    %v1092 = vshrl.u32 %v1091, 7
    %v1093 = vsub.s32 1, %v1092
    %v1094 = vrot.slane %v46, %v1093
    %v1095 = vmul.f32 %v1089, %v1094
    %v1096 = vmul.f32 %v1090, %v1094
    %v1097 = vlaneseq
    %v1098 = vshrl.u32 %v1097, 7
    %v1099 = vsub.s32 2, %v1098
    %v1100 = vrot.slane %v46, %v1099
    %v1101 = vadd.f32 %v1095, %v1100
    %v1102 = vadd.f32 %v1096, %v1100
    %v1103 = vld [vmem:[#allocation2 + $0x318] sm:$0xff]
    %v1104 = vld [vmem:[#allocation2 + $0x320] sm:$0xff]
    %v1105 = vld [vmem:[#allocation2 + $0x328] sm:$0xff]
    %v1106 = vld [vmem:[#allocation2 + $0x330] sm:$0xff]
    %v1107 = vld [vmem:[#allocation2 + $0x338] sm:$0xff]
    %v1108 = vld [vmem:[#allocation2 + $0x340] sm:$0xff]
    %v1109 = vld [vmem:[#allocation2 + $0x348] sm:$0xff]
    %v1110 = vld [vmem:[#allocation2 + $0x350] sm:$0xff]
    %v1111 = vld [vmem:[#allocation2 + $0x358] sm:$0xff]
    %v1112 = vld [vmem:[#allocation2 + $0x360] sm:$0xff]
    %v1113 = vld [vmem:[#allocation2 + $0x368] sm:$0xff]
    %v1114 = vld [vmem:[#allocation2 + $0x370] sm:$0xff]
    %v1115 = vld [vmem:[#allocation2 + $0x378] sm:$0xff]
    %v1116 = vld [vmem:[#allocation2 + $0x380] sm:$0xff]
    %v1117 = vld [vmem:[#allocation2 + $0x388] sm:$0xff]
    %v1118 = vld [vmem:[#allocation2 + $0x390] sm:$0xff]
    %v1119 = vlaneseq
    %v1120 = vshrl.u32 %v1119, 7
    %v1121 = vsub.s32 3, %v1120
    %v1122 = vrot.slane %v46, %v1121
    %1123 = vmatprep.subr.mxu0 0.0
    %1124 = vmatpush1.msra.mxu0 %v1103
    %1125 = vmatprep.subr.mxu0 0.0
    %1126 = vmatpush1.msra.mxu0 %v1104
    %1127 = vmatprep.subr.mxu0 0.0
    %1128 = vmatpush1.msra.mxu0 %v1105
    %1129 = vmatprep.subr.mxu0 0.0
    %1130 = vmatpush1.msra.mxu0 %v1106
    %1131 = vmatprep.subr.mxu0 0.0
    %1132 = vmatpush1.msra.mxu0 %v1107
    %1133 = vmatprep.subr.mxu0 0.0
    %1134 = vmatpush1.msra.mxu0 %v1108
    %1135 = vmatprep.subr.mxu0 0.0
    %1136 = vmatpush1.msra.mxu0 %v1109
    %1137 = vmatprep.subr.mxu0 0.0
    %1138 = vmatpush1.msra.mxu0 %v1110
    %1139 = vmatprep.subr.mxu0 0.0
    %1140 = vmatpush1.msra.mxu0 %v1111
    %1141 = vmatprep.subr.mxu0 0.0
    %1142 = vmatpush1.msra.mxu0 %v1112
    %1143 = vmatprep.subr.mxu0 0.0
    %1144 = vmatpush1.msra.mxu0 %v1113
    %1145 = vmatprep.subr.mxu0 0.0
    %1146 = vmatpush1.msra.mxu0 %v1114
    %1147 = vmatprep.subr.mxu0 0.0
    %1148 = vmatpush1.msra.mxu0 %v1115
    %1149 = vmatprep.subr.mxu0 0.0
    %1150 = vmatpush1.msra.mxu0 %v1116
    %1151 = vmatprep.subr.mxu0 0.0
    %1152 = vmatpush1.msra.mxu0 %v1117
    %1153 = vmatprep.subr.mxu0 0.0
    %1154 = vmatpush1.msra.mxu0 %v1118
    %1155 = vmatprep.subr.mxu0 0.0
    %1156 = vmatpush1.msra.mxu0 0.0
    %1157 = vmatprep.subr.mxu0 0.0
    %1158 = vmatpush1.msra.mxu0 0.0
    %1159 = vmatprep.subr.mxu0 0.0
    %1160 = vmatpush1.msra.mxu0 0.0
    %1161 = vmatprep.subr.mxu0 0.0
    %1162 = vmatpush1.msra.mxu0 0.0
    %1163 = vmatprep.subr.mxu0 0.0
    %1164 = vmatpush1.msra.mxu0 0.0
    %1165 = vmatprep.subr.mxu0 0.0
    %1166 = vmatpush1.msra.mxu0 0.0
    %1167 = vmatprep.subr.mxu0 0.0
    %1168 = vmatpush1.msra.mxu0 0.0
    %1169 = vmatprep.subr.mxu0 0.0
    %1170 = vmatpush1.msra.mxu0 0.0
    %1171 = vmatprep.subr.mxu0 0.0
    %1172 = vmatpush1.msra.mxu0 0.0
    %1173 = vmatprep.subr.mxu0 0.0
    %1174 = vmatpush1.msra.mxu0 0.0
    %1175 = vmatprep.subr.mxu0 0.0
    %1176 = vmatpush1.msra.mxu0 0.0
    %1177 = vmatprep.subr.mxu0 0.0
    %1178 = vmatpush1.msra.mxu0 0.0
    %1179 = vmatprep.subr.mxu0 0.0
    %1180 = vmatpush1.msra.mxu0 0.0
    %1181 = vmatprep.subr.mxu0 0.0
    %1182 = vmatpush1.msra.mxu0 0.0
    %1183 = vmatprep.subr.mxu0 0.0
    %1184 = vmatpush1.msra.mxu0 0.0
    %1185 = vmatprep.subr.mxu0 0.0
    %1186 = vmatpush1.msra.mxu0 0.0
    %1187 = vmatprep.mubr.f32.mxu0 0.0
    %1188 = vmatmul.mubr.f32.gmra.mrb[0].mxu0 %v1101
    %v1189 = vpop.f32.mrb[0].mxu0
    %v1190 = vadd.f32 %v1122, %v1189
    %v1191 = vpop.f32.mrb[0].mxu0
    %1192 = vmatprep.mubr.f32.mxu0 0.0
    %1193 = vmatmul.mubr.f32.gmra.mrb[0].mxu0 %v1102
    %v1194 = vpop.f32.mrb[0].mxu0
    %v1195 = vadd.f32 %v1122, %v1194
    %v1196 = vpop.f32.mrb[0].mxu0
    %1197 = vdwg.mxu0
    %v1199 = vrot.slane %v1195, 6
    %1200 = vrot.lane.b32.xlu0 %v1199, 64
    %v1201 = vpop.permute.xlu0 %1200
    %vm1203 = vcmask 523264
    %v1204 = vsel %vm1203, %v1190, %v1201
    %v1205 = vlaneseq
    %v1206 = vshrl.u32 %v1205, 7
    %v1207 = vsub.s32 4, %v1206
    %v1208 = vrot.slane %v46, %v1207
    %v1209 = vmul.f32 %v1208, 0.0
    %v1210 = vlaneseq
    %v1211 = vshrl.u32 %v1210, 7
    %v1212 = vsub.s32 5, %v1211
    %v1213 = vrot.slane %v46, %v1212
    %v1214 = vmul.f32 %v1213, %v1204
    %v1215 = vadd.f32 %v1209, %v1214
    %v1216 = vrot.slane %v1195, 2
    %1217 = vrot.lane.b32.xlu0 %v1216, 64
    %v1218 = vpop.permute.xlu0 %1217
    %v1220 = vsel %vm1203, %v1190, %v1218
    %v1221 = vmul.f32 %v1208, %v1215
    %v1222 = vmul.f32 %v1213, %v1220
    %v1224 = vrot.slane %v1222, 2
    %v1226 = vadd.f32 %v1221, %v1224
    %v1227 = vmul.f32 %v1208, %v1226
    %v1229 = vrot.slane %v1214, 4
    %v1231 = vadd.f32 %v1227, %v1229
    %v1232 = vmul.f32 %v1208, %v1231
    %v1233 = vrot.slane %v1222, 6
    %v1235 = vadd.f32 %v1232, %v1233
    %v1237 = vrot.slane %v1190, 6
    %1238 = vrot.lane.b32.xlu0 %v1237, 64
    %v1239 = vpop.permute.xlu0 %1238
    %v1241 = vsel %vm1203, %v1195, %v1239
    %v1242 = vmul.f32 %v1208, %v1235
    %v1243 = vmul.f32 %v1213, %v1241
    %v1244 = vadd.f32 %v1242, %v1243
    %v1245 = vrot.slane %v1190, 2
    %1246 = vrot.lane.b32.xlu0 %v1245, 64
    %v1247 = vpop.permute.xlu0 %1246
    %v1249 = vsel %vm1203, %v1195, %v1247
    %v1250 = vmul.f32 %v1208, %v1244
    %v1251 = vmul.f32 %v1213, %v1249
    %v1253 = vrot.slane %v1251, 2
    %v1255 = vadd.f32 %v1250, %v1253
    %v1256 = vmul.f32 %v1208, %v1255
    %v1258 = vrot.slane %v1243, 4
    %v1260 = vadd.f32 %v1256, %v1258
    %v1261 = vmul.f32 %v1208, %v1260
    %v1262 = vrot.slane %v1251, 6
    %v1264 = vadd.f32 %v1261, %v1262
    %v1266 = vrot.slane %v1226, 6
    %v1269 = vrot.slane %v1231, 4
    %v1272 = vrot.slane %v1235, 2
    %v1275 = vrot.slane %v1255, 6
    %v1278 = vrot.slane %v1260, 4
    %v1281 = vrot.slane %v1264, 2
    %vm1283 = vcmask 1041408
    %v1284 = vsel %vm1283, %v1215, %v1266
    %vm1285 = vcmask 1043456
    %v1286 = vsel %vm1285, %v1284, %v1269
    %vm1287 = vcmask 1045504
    %v1288 = vsel %vm1287, %v1286, %v1272
    %v1289 = vsel %vm1283, %v1244, %v1275
    %v1290 = vsel %vm1285, %v1289, %v1278
    %v1291 = vsel %vm1287, %v1290, %v1281
    %v1292 = vrot.slane %v1260, 6
    %v1294 = vrot.slane %v1255, 4
    %v1297 = vrot.slane %v1244, 2
    %v1299 = vrot.slane %v1231, 6
    %v1301 = vrot.slane %v1226, 4
    %v1304 = vrot.slane %v1215, 2
    %v1306 = vsel %vm1283, %v1264, %v1292
    %v1307 = vsel %vm1285, %v1306, %v1294
    %v1308 = vsel %vm1287, %v1307, %v1297
    %v1309 = vsel %vm1283, %v1235, %v1299
    %v1310 = vsel %vm1285, %v1309, %v1301
    %v1311 = vsel %vm1287, %v1310, %v1304
    %v1312 = vld [vmem:[#allocation2 + $0x398] sm:$0xff]
    %v1313 = vld [vmem:[#allocation2 + $0x3a0] sm:$0xff]
    %v1314 = vld [vmem:[#allocation2 + $0x3a8] sm:$0xff]
    %v1315 = vld [vmem:[#allocation2 + $0x3b0] sm:$0xff]
    %v1316 = vld [vmem:[#allocation2 + $0x3b8] sm:$0xff]
    %v1317 = vld [vmem:[#allocation2 + $0x3c0] sm:$0xff]
    %v1318 = vld [vmem:[#allocation2 + $0x3c8] sm:$0xff]
    %v1319 = vld [vmem:[#allocation2 + $0x3d0] sm:$0xff]
    %v1321 = vsel %vm1203, %v1288, 0
    %v1324 = vsel %vm1203, %v1291, 0
    %1326 = vmatprep.subr.mxu0 0.0
    %1327 = vmatpush1.msra.mxu0 %v1312
    %1328 = vmatprep.subr.mxu0 0.0
    %1329 = vmatpush1.msra.mxu0 %v1313
    %1330 = vmatprep.subr.mxu0 0.0
    %1331 = vmatpush1.msra.mxu0 %v1314
    %1332 = vmatprep.subr.mxu0 0.0
    %1333 = vmatpush1.msra.mxu0 %v1315
    %1334 = vmatprep.subr.mxu0 0.0
    %1335 = vmatpush1.msra.mxu0 %v1316
    %1336 = vmatprep.subr.mxu0 0.0
    %1337 = vmatpush1.msra.mxu0 %v1317
    %1338 = vmatprep.subr.mxu0 0.0
    %1339 = vmatpush1.msra.mxu0 %v1318
    %1340 = vmatprep.subr.mxu0 0.0
    %1341 = vmatpush1.msra.mxu0 %v1319
    %1342 = vmatprep.subr.mxu0 0.0
    %1343 = vmatpush1.msra.mxu0 0.0
    %1344 = vmatprep.subr.mxu0 0.0
    %1345 = vmatpush1.msra.mxu0 0.0
    %1346 = vmatprep.subr.mxu0 0.0
    %1347 = vmatpush1.msra.mxu0 0.0
    %1348 = vmatprep.subr.mxu0 0.0
    %1349 = vmatpush1.msra.mxu0 0.0
    %1350 = vmatprep.subr.mxu0 0.0
    %1351 = vmatpush1.msra.mxu0 0.0
    %1352 = vmatprep.subr.mxu0 0.0
    %1353 = vmatpush1.msra.mxu0 0.0
    %1354 = vmatprep.subr.mxu0 0.0
    %1355 = vmatpush1.msra.mxu0 0.0
    %1356 = vmatprep.subr.mxu0 0.0
    %1357 = vmatpush1.msra.mxu0 0.0
    %1358 = vmatprep.subr.mxu0 0.0
    %1359 = vmatpush1.msra.mxu0 0.0
    %1360 = vmatprep.subr.mxu0 0.0
    %1361 = vmatpush1.msra.mxu0 0.0
    %1362 = vmatprep.subr.mxu0 0.0
    %1363 = vmatpush1.msra.mxu0 0.0
    %1364 = vmatprep.subr.mxu0 0.0
    %1365 = vmatpush1.msra.mxu0 0.0
    %1366 = vmatprep.subr.mxu0 0.0
    %1367 = vmatpush1.msra.mxu0 0.0
    %1368 = vmatprep.subr.mxu0 0.0
    %1369 = vmatpush1.msra.mxu0 0.0
    %1370 = vmatprep.subr.mxu0 0.0
    %1371 = vmatpush1.msra.mxu0 0.0
    %1372 = vmatprep.subr.mxu0 0.0
    %1373 = vmatpush1.msra.mxu0 0.0
    %1374 = vmatprep.subr.mxu0 0.0
    %1375 = vmatpush1.msra.mxu0 0.0
    %1376 = vmatprep.subr.mxu0 0.0
    %1377 = vmatpush1.msra.mxu0 0.0
    %1378 = vmatprep.subr.mxu0 0.0
    %1379 = vmatpush1.msra.mxu0 0.0
    %1380 = vmatprep.subr.mxu0 0.0
    %1381 = vmatpush1.msra.mxu0 0.0
    %1382 = vmatprep.subr.mxu0 0.0
    %1383 = vmatpush1.msra.mxu0 0.0
    %1384 = vmatprep.subr.mxu0 0.0
    %1385 = vmatpush1.msra.mxu0 0.0
    %1386 = vmatprep.subr.mxu0 0.0
    %1387 = vmatpush1.msra.mxu0 0.0
    %1388 = vmatprep.subr.mxu0 0.0
    %1389 = vmatpush1.msra.mxu0 0.0
    %1390 = vmatprep.mubr.f32.mxu0 0.0
    %1391 = vmatmul.mubr.f32.gmra.mrb[0].mxu0 %v1321
    %v1392 = vpop.f32.mrb[0].mxu0
    %v1393 = vadd.f32 0.0, %v1392
    %v1394 = vpop.f32.mrb[0].mxu0
    %1395 = vmatprep.mubr.f32.mxu0 0.0
    %1396 = vmatmul.mubr.f32.gmra.mrb[0].mxu0 %v1324
    %v1397 = vpop.f32.mrb[0].mxu0
    %v1398 = vadd.f32 0.0, %v1397
    %v1399 = vpop.f32.mrb[0].mxu0
    %1400 = vdwg.mxu0
    %v1401 = vadd.f32 %v931, %v1393
    %v1402 = vadd.f32 %v932, %v1398
    %v1403 = vld [vmem:[#allocation2 + $0x3d8] sm:$0xff]
    %v1404 = vld [vmem:[#allocation2 + $0x3e0] sm:$0xff]
    %v1405 = vld [vmem:[#allocation2 + $0x3e8] sm:$0xff]
    %v1406 = vld [vmem:[#allocation2 + $0x3f0] sm:$0xff]
    %v1407 = vld [vmem:[#allocation2 + $0x3f8] sm:$0xff]
    %v1408 = vld [vmem:[#allocation2 + $0x400] sm:$0xff]
    %v1409 = vld [vmem:[#allocation2 + $0x408] sm:$0xff]
    %v1410 = vld [vmem:[#allocation2 + $0x410] sm:$0xff]
    %1413 = vrot.lane.b32.xlu0 %v1308, 64
    %v1414 = vpop.permute.xlu0 %1413
    %1415 = vrot.lane.b32.xlu0 %v1311, 64
    %v1416 = vpop.permute.xlu0 %1415
    %v1417 = vsel %vm1203, %v1414, 0
    %v1419 = vsel %vm1203, %v1416, 0
    %1421 = vmatprep.subr.mxu0 0.0
    %1422 = vmatpush1.msra.mxu0 %v1403
    %1423 = vmatprep.subr.mxu0 0.0
    %1424 = vmatpush1.msra.mxu0 %v1404
    %1425 = vmatprep.subr.mxu0 0.0
    %1426 = vmatpush1.msra.mxu0 %v1405
    %1427 = vmatprep.subr.mxu0 0.0
    %1428 = vmatpush1.msra.mxu0 %v1406
    %1429 = vmatprep.subr.mxu0 0.0
    %1430 = vmatpush1.msra.mxu0 %v1407
    %1431 = vmatprep.subr.mxu0 0.0
    %1432 = vmatpush1.msra.mxu0 %v1408
    %1433 = vmatprep.subr.mxu0 0.0
    %1434 = vmatpush1.msra.mxu0 %v1409
    %1435 = vmatprep.subr.mxu0 0.0
    %1436 = vmatpush1.msra.mxu0 %v1410
    %1437 = vmatprep.subr.mxu0 0.0
    %1438 = vmatpush1.msra.mxu0 0.0
    %1439 = vmatprep.subr.mxu0 0.0
    %1440 = vmatpush1.msra.mxu0 0.0
    %1441 = vmatprep.subr.mxu0 0.0
    %1442 = vmatpush1.msra.mxu0 0.0
    %1443 = vmatprep.subr.mxu0 0.0
    %1444 = vmatpush1.msra.mxu0 0.0
    %1445 = vmatprep.subr.mxu0 0.0
    %1446 = vmatpush1.msra.mxu0 0.0
    %1447 = vmatprep.subr.mxu0 0.0
    %1448 = vmatpush1.msra.mxu0 0.0
    %1449 = vmatprep.subr.mxu0 0.0
    %1450 = vmatpush1.msra.mxu0 0.0
    %1451 = vmatprep.subr.mxu0 0.0
    %1452 = vmatpush1.msra.mxu0 0.0
    %1453 = vmatprep.subr.mxu0 0.0
    %1454 = vmatpush1.msra.mxu0 0.0
    %1455 = vmatprep.subr.mxu0 0.0
    %1456 = vmatpush1.msra.mxu0 0.0
    %1457 = vmatprep.subr.mxu0 0.0
    %1458 = vmatpush1.msra.mxu0 0.0
    %1459 = vmatprep.subr.mxu0 0.0
    %1460 = vmatpush1.msra.mxu0 0.0
    %1461 = vmatprep.subr.mxu0 0.0
    %1462 = vmatpush1.msra.mxu0 0.0
    %1463 = vmatprep.subr.mxu0 0.0
    %1464 = vmatpush1.msra.mxu0 0.0
    %1465 = vmatprep.subr.mxu0 0.0
    %1466 = vmatpush1.msra.mxu0 0.0
    %1467 = vmatprep.subr.mxu0 0.0
    %1468 = vmatpush1.msra.mxu0 0.0
    %1469 = vmatprep.subr.mxu0 0.0
    %1470 = vmatpush1.msra.mxu0 0.0
    %1471 = vmatprep.subr.mxu0 0.0
    %1472 = vmatpush1.msra.mxu0 0.0
    %1473 = vmatprep.subr.mxu0 0.0
    %1474 = vmatpush1.msra.mxu0 0.0
    %1475 = vmatprep.subr.mxu0 0.0
    %1476 = vmatpush1.msra.mxu0 0.0
    %1477 = vmatprep.subr.mxu0 0.0
    %1478 = vmatpush1.msra.mxu0 0.0
    %1479 = vmatprep.subr.mxu0 0.0
    %1480 = vmatpush1.msra.mxu0 0.0
    %1481 = vmatprep.subr.mxu0 0.0
    %1482 = vmatpush1.msra.mxu0 0.0
    %1483 = vmatprep.subr.mxu0 0.0
    %1484 = vmatpush1.msra.mxu0 0.0
    %1485 = vmatprep.mubr.f32.mxu0 0.0
    %1486 = vmatmul.mubr.f32.gmra.mrb[0].mxu0 %v1417
    %v1487 = vpop.f32.mrb[0].mxu0
    %v1488 = vadd.f32 0.0, %v1487
    %v1489 = vpop.f32.mrb[0].mxu0
    %1490 = vmatprep.mubr.f32.mxu0 0.0
    %1491 = vmatmul.mubr.f32.gmra.mrb[0].mxu0 %v1419
    %v1492 = vpop.f32.mrb[0].mxu0
    %v1493 = vadd.f32 0.0, %v1492
    %v1494 = vpop.f32.mrb[0].mxu0
    %1495 = vdwg.mxu0
    %v1496 = vadd.f32 %v1401, %v1488
    %v1497 = vadd.f32 %v1402, %v1493
    %v1498 = vlaneseq
    %v1499 = vshrl.u32 %v1498, 7
    %v1500 = vsub.s32 6, %v1499
    %v1501 = vrot.slane %v46, %v1500
    %v1502 = vadd.f32 %v1496, %v1501
    %v1503 = vadd.f32 %v1497, %v1501
    %v1504 = vld [vmem:[#allocation4] sm:$0xff]
    %v1505 = vld [vmem:[#allocation4 + $0x8] sm:$0xff]
    %v1506 = vld [vmem:[#allocation4 + $0x10] sm:$0xff]
    %v1507 = vld [vmem:[#allocation4 + $0x18] sm:$0xff]
    %v1508 = vld [vmem:[#allocation4 + $0x20] sm:$0xff]
    %v1509 = vld [vmem:[#allocation4 + $0x28] sm:$0xff]
    %v1510 = vld [vmem:[#allocation4 + $0x30] sm:$0xff]
    %v1511 = vld [vmem:[#allocation4 + $0x38] sm:$0xff]
    %v1512 = vld [vmem:[#allocation4 + $0x40] sm:$0xff]
    %v1513 = vld [vmem:[#allocation4 + $0x48] sm:$0xff]
    %v1514 = vld [vmem:[#allocation4 + $0x50] sm:$0xff]
    %v1515 = vld [vmem:[#allocation4 + $0x58] sm:$0xff]
    %v1516 = vld [vmem:[#allocation4 + $0x60] sm:$0xff]
    %v1517 = vld [vmem:[#allocation4 + $0x68] sm:$0xff]
    %v1518 = vld [vmem:[#allocation4 + $0x70] sm:$0xff]
    %v1519 = vld [vmem:[#allocation4 + $0x78] sm:$0xff]
    %v1520 = vld [vmem:[#allocation4 + $0x80] sm:$0xff]
    %v1521 = vld [vmem:[#allocation4 + $0x88] sm:$0xff]
    %v1522 = vld [vmem:[#allocation4 + $0x90] sm:$0xff]
    %v1523 = vld [vmem:[#allocation4 + $0x98] sm:$0xff]
    %v1524 = vld [vmem:[#allocation4 + $0xa0] sm:$0xff]
    %v1525 = vld [vmem:[#allocation4 + $0xa8] sm:$0xff]
    %v1526 = vld [vmem:[#allocation4 + $0xb0] sm:$0xff]
    %v1527 = vld [vmem:[#allocation4 + $0xb8] sm:$0xff]
    %v1528 = vld [vmem:[#allocation4 + $0xc0] sm:$0xff]
    %v1529 = vld [vmem:[#allocation4 + $0xc8] sm:$0xff]
    %v1530 = vld [vmem:[#allocation4 + $0xd0] sm:$0xff]
    %v1531 = vld [vmem:[#allocation4 + $0xd8] sm:$0xff]
    %v1532 = vld [vmem:[#allocation4 + $0xe0] sm:$0xff]
    %v1533 = vld [vmem:[#allocation4 + $0xe8] sm:$0xff]
    %v1534 = vld [vmem:[#allocation4 + $0xf0] sm:$0xff]
    %v1535 = vld [vmem:[#allocation4 + $0xf8] sm:$0xff]
    %s1536 = scalar_lea.vmem [#allocation4], 256
    %v1537 = vld [vmem:[%s1536] ss:$8 sm:$0x3]
    %v1539 = vlaneseq
    %v1540 = vshrl.u32 %v1539, 7
    %v1541 = vsub.s32 0, %v1540
    %v1542 = vrot.slane %v1537, %v1541
    %v1543 = vlaneseq
    %v1544 = vshrl.u32 %v1543, 7
    %v1545 = vsub.s32 1, %v1544
    %v1546 = vrot.slane %v1537, %v1545
    %1549 = vmatprep.subr.mxu0 %v1505
    %1550 = vmatpush1.msra.mxu0 %v1504
    %1551 = vmatprep.subr.mxu0 %v1507
    %1552 = vmatpush1.msra.mxu0 %v1506
    %1553 = vmatprep.subr.mxu0 %v1509
    %1554 = vmatpush1.msra.mxu0 %v1508
    %1555 = vmatprep.subr.mxu0 %v1511
    %1556 = vmatpush1.msra.mxu0 %v1510
    %1557 = vmatprep.subr.mxu0 %v1513
    %1558 = vmatpush1.msra.mxu0 %v1512
    %1559 = vmatprep.subr.mxu0 %v1515
    %1560 = vmatpush1.msra.mxu0 %v1514
    %1561 = vmatprep.subr.mxu0 %v1517
    %1562 = vmatpush1.msra.mxu0 %v1516
    %1563 = vmatprep.subr.mxu0 %v1519
    %1564 = vmatpush1.msra.mxu0 %v1518
    %1565 = vmatprep.subr.mxu0 %v1521
    %1566 = vmatpush1.msra.mxu0 %v1520
    %1567 = vmatprep.subr.mxu0 %v1523
    %1568 = vmatpush1.msra.mxu0 %v1522
    %1569 = vmatprep.subr.mxu0 %v1525
    %1570 = vmatpush1.msra.mxu0 %v1524
    %1571 = vmatprep.subr.mxu0 %v1527
    %1572 = vmatpush1.msra.mxu0 %v1526
    %1573 = vmatprep.subr.mxu0 %v1529
    %1574 = vmatpush1.msra.mxu0 %v1528
    %1575 = vmatprep.subr.mxu0 %v1531
    %1576 = vmatpush1.msra.mxu0 %v1530
    %1577 = vmatprep.subr.mxu0 %v1533
    %1578 = vmatpush1.msra.mxu0 %v1532
    %1579 = vmatprep.subr.mxu0 %v1535
    %1580 = vmatpush1.msra.mxu0 %v1534
    %1581 = vmatprep.subr.mxu0 0.0
    %1582 = vmatpush1.msra.mxu0 0.0
    %1583 = vmatprep.subr.mxu0 0.0
    %1584 = vmatpush1.msra.mxu0 0.0
    %1585 = vmatprep.subr.mxu0 0.0
    %1586 = vmatpush1.msra.mxu0 0.0
    %1587 = vmatprep.subr.mxu0 0.0
    %1588 = vmatpush1.msra.mxu0 0.0
    %1589 = vmatprep.subr.mxu0 0.0
    %1590 = vmatpush1.msra.mxu0 0.0
    %1591 = vmatprep.subr.mxu0 0.0
    %1592 = vmatpush1.msra.mxu0 0.0
    %1593 = vmatprep.subr.mxu0 0.0
    %1594 = vmatpush1.msra.mxu0 0.0
    %1595 = vmatprep.subr.mxu0 0.0
    %1596 = vmatpush1.msra.mxu0 0.0
    %1597 = vmatprep.subr.mxu0 0.0
    %1598 = vmatpush1.msra.mxu0 0.0
    %1599 = vmatprep.subr.mxu0 0.0
    %1600 = vmatpush1.msra.mxu0 0.0
    %1601 = vmatprep.subr.mxu0 0.0
    %1602 = vmatpush1.msra.mxu0 0.0
    %1603 = vmatprep.subr.mxu0 0.0
    %1604 = vmatpush1.msra.mxu0 0.0
    %1605 = vmatprep.subr.mxu0 0.0
    %1606 = vmatpush1.msra.mxu0 0.0
    %1607 = vmatprep.subr.mxu0 0.0
    %1608 = vmatpush1.msra.mxu0 0.0
    %1609 = vmatprep.subr.mxu0 0.0
    %1610 = vmatpush1.msra.mxu0 0.0
    %1611 = vmatprep.subr.mxu0 0.0
    %1612 = vmatpush1.msra.mxu0 0.0
    %1613 = vmatprep.mubr.f32.mxu0 0.0
    %1614 = vmatmul.mubr.f32.gmra.mrb[0].mxu0 %v1502
    %v1615 = vpop.f32.mrb[0].mxu0
    %v1616 = vadd.f32 %v1542, %v1615
    %v1617 = vpop.f32.mrb[0].mxu0
    %v1618 = vadd.f32 %v1546, %v1617
    %1619 = vmatprep.mubr.f32.mxu0 0.0
    %1620 = vmatmul.mubr.f32.gmra.mrb[0].mxu0 %v1503
    %v1621 = vpop.f32.mrb[0].mxu0
    %v1622 = vadd.f32 %v1542, %v1621
    %v1623 = vpop.f32.mrb[0].mxu0
    %v1624 = vadd.f32 %v1546, %v1623
    %1625 = vdwg.mxu0
    %v1626 = vmul.f32 %v1616, %v1616
    %v1627 = vmul.f32 %v1618, %v1618
    %v1628 = vmul.f32 %v1622, %v1622
    %v1629 = vmul.f32 %v1624, %v1624
    %v1630 = vmul.f32 %v1616, %v1626
    %v1631 = vmul.f32 %v1618, %v1627
    %v1632 = vmul.f32 %v1622, %v1628
    %v1633 = vmul.f32 %v1624, %v1629
    %v1634 = vmul.f32 %v1630, 0.044715
    %v1635 = vmul.f32 %v1631, 0.044715
    %v1636 = vmul.f32 %v1632, 0.044715
    %v1637 = vmul.f32 %v1633, 0.044715
    %v1638 = vadd.f32 %v1616, %v1634
    %v1639 = vadd.f32 %v1618, %v1635
    %v1640 = vadd.f32 %v1622, %v1636
    %v1641 = vadd.f32 %v1624, %v1637
    %v1642 = vmul.f32 %v1638, 0.7978846
    %v1643 = vmul.f32 %v1639, 0.7978846
    %v1644 = vmul.f32 %v1640, 0.7978846
    %v1645 = vmul.f32 %v1641, 0.7978846
    %v1646 = vtanh.pop %v1642
    %v1647 = vtanh.pop %v1643
    %v1648 = vtanh.pop %v1644
    %v1649 = vtanh.pop %v1645
    %v1650 = vadd.f32 %v1646, 1.0
    %v1651 = vadd.f32 %v1647, 1.0
    %v1652 = vadd.f32 %v1648, 1.0
    %v1653 = vadd.f32 %v1649, 1.0
    %v1654 = vmul.f32 %v1650, 0.5
    %v1655 = vmul.f32 %v1651, 0.5
    %v1656 = vmul.f32 %v1652, 0.5
    %v1657 = vmul.f32 %v1653, 0.5
    %v1658 = vmul.f32 %v1616, %v1654
    %v1659 = vmul.f32 %v1618, %v1655
    %v1660 = vmul.f32 %v1622, %v1656
    %v1661 = vmul.f32 %v1624, %v1657
    %v1662 = vld [vmem:[#allocation2 + $0x418] sm:$0xff]
    %v1663 = vld [vmem:[#allocation2 + $0x420] sm:$0xff]
    %v1664 = vld [vmem:[#allocation2 + $0x428] sm:$0xff]
    %v1665 = vld [vmem:[#allocation2 + $0x430] sm:$0xff]
    %v1666 = vld [vmem:[#allocation2 + $0x438] sm:$0xff]
    %v1667 = vld [vmem:[#allocation2 + $0x440] sm:$0xff]
    %v1668 = vld [vmem:[#allocation2 + $0x448] sm:$0xff]
    %v1669 = vld [vmem:[#allocation2 + $0x450] sm:$0xff]
    %v1670 = vld [vmem:[#allocation2 + $0x458] sm:$0xff]
    %v1671 = vld [vmem:[#allocation2 + $0x460] sm:$0xff]
    %v1672 = vld [vmem:[#allocation2 + $0x468] sm:$0xff]
    %v1673 = vld [vmem:[#allocation2 + $0x470] sm:$0xff]
    %v1674 = vld [vmem:[#allocation2 + $0x478] sm:$0xff]
    %v1675 = vld [vmem:[#allocation2 + $0x480] sm:$0xff]
    %v1676 = vld [vmem:[#allocation2 + $0x488] sm:$0xff]
    %v1677 = vld [vmem:[#allocation2 + $0x490] sm:$0xff]
    %v1678 = vld [vmem:[#allocation2 + $0x498] sm:$0xff]
    %v1679 = vld [vmem:[#allocation2 + $0x4a0] sm:$0xff]
    %v1680 = vld [vmem:[#allocation2 + $0x4a8] sm:$0xff]
    %v1681 = vld [vmem:[#allocation2 + $0x4b0] sm:$0xff]
    %v1682 = vlaneseq
    %v1683 = vshrl.u32 %v1682, 7
    %v1684 = vsub.s32 7, %v1683
    %v1685 = vrot.slane %v46, %v1684
    %vm1686 = vcmask 261120
    %v1688 = vsel %vm1686, %v1659, 0
    %v1691 = vsel %vm1686, %v1661, 0
    %1693 = vmatprep.subr.mxu0 0.0
    %1694 = vmatpush1.msra.mxu0 %v1662
    %1695 = vmatprep.subr.mxu0 0.0
    %1696 = vmatpush1.msra.mxu0 %v1663
    %1697 = vmatprep.subr.mxu0 0.0
    %1698 = vmatpush1.msra.mxu0 %v1664
    %1699 = vmatprep.subr.mxu0 0.0
    %1700 = vmatpush1.msra.mxu0 %v1665
    %1701 = vmatprep.subr.mxu0 0.0
    %1702 = vmatpush1.msra.mxu0 %v1666
    %1703 = vmatprep.subr.mxu0 0.0
    %1704 = vmatpush1.msra.mxu0 %v1667
    %1705 = vmatprep.subr.mxu0 0.0
    %1706 = vmatpush1.msra.mxu0 %v1668
    %1707 = vmatprep.subr.mxu0 0.0
    %1708 = vmatpush1.msra.mxu0 %v1669
    %1709 = vmatprep.subr.mxu0 0.0
    %1710 = vmatpush1.msra.mxu0 %v1670
    %1711 = vmatprep.subr.mxu0 0.0
    %1712 = vmatpush1.msra.mxu0 %v1671
    %1713 = vmatprep.subr.mxu0 0.0
    %1714 = vmatpush1.msra.mxu0 %v1672
    %1715 = vmatprep.subr.mxu0 0.0
    %1716 = vmatpush1.msra.mxu0 %v1673
    %1717 = vmatprep.subr.mxu0 0.0
    %1718 = vmatpush1.msra.mxu0 %v1674
    %1719 = vmatprep.subr.mxu0 0.0
    %1720 = vmatpush1.msra.mxu0 %v1675
    %1721 = vmatprep.subr.mxu0 0.0
    %1722 = vmatpush1.msra.mxu0 %v1676
    %1723 = vmatprep.subr.mxu0 0.0
    %1724 = vmatpush1.msra.mxu0 %v1677
    %1725 = vmatprep.subr.mxu0 0.0
    %1726 = vmatpush1.msra.mxu0 %v1678
    %1727 = vmatprep.subr.mxu0 0.0
    %1728 = vmatpush1.msra.mxu0 %v1679
    %1729 = vmatprep.subr.mxu0 0.0
    %1730 = vmatpush1.msra.mxu0 %v1680
    %1731 = vmatprep.subr.mxu0 0.0
    %1732 = vmatpush1.msra.mxu0 %v1681
    %1733 = vmatprep.subr.mxu0 0.0
    %1734 = vmatpush1.msra.mxu0 0.0
    %1735 = vmatprep.subr.mxu0 0.0
    %1736 = vmatpush1.msra.mxu0 0.0
    %1737 = vmatprep.subr.mxu0 0.0
    %1738 = vmatpush1.msra.mxu0 0.0
    %1739 = vmatprep.subr.mxu0 0.0
    %1740 = vmatpush1.msra.mxu0 0.0
    %1741 = vmatprep.subr.mxu0 0.0
    %1742 = vmatpush1.msra.mxu0 0.0
    %1743 = vmatprep.subr.mxu0 0.0
    %1744 = vmatpush1.msra.mxu0 0.0
    %1745 = vmatprep.subr.mxu0 0.0
    %1746 = vmatpush1.msra.mxu0 0.0
    %1747 = vmatprep.subr.mxu0 0.0
    %1748 = vmatpush1.msra.mxu0 0.0
    %1749 = vmatprep.subr.mxu0 0.0
    %1750 = vmatpush1.msra.mxu0 0.0
    %1751 = vmatprep.subr.mxu0 0.0
    %1752 = vmatpush1.msra.mxu0 0.0
    %1753 = vmatprep.subr.mxu0 0.0
    %1754 = vmatpush1.msra.mxu0 0.0
    %1755 = vmatprep.subr.mxu0 0.0
    %1756 = vmatpush1.msra.mxu0 0.0
    %1757 = vmatprep.mubr.f32.mxu0 %v1688
    %1758 = vmatmul.mubr.f32.gmra.mrb[0].mxu0 %v1658
    %v1759 = vpop.f32.mrb[0].mxu0
    %v1760 = vadd.f32 %v1685, %v1759
    %v1761 = vpop.f32.mrb[0].mxu0
    %1762 = vmatprep.mubr.f32.mxu0 %v1691
    %1763 = vmatmul.mubr.f32.gmra.mrb[0].mxu0 %v1660
    %v1764 = vpop.f32.mrb[0].mxu0
    %v1765 = vadd.f32 %v1685, %v1764
    %v1766 = vpop.f32.mrb[0].mxu0
    %1767 = vdwg.mxu0
    %v1768 = vld [vmem:[#allocation2 + $0x4b8] sm:$0x3]
    %vm1769 = vcmask 130048
    %v1771 = vsel %vm1769, %v1768, 0
    %1773 = vmatprep.subr.mxu0 0.0
    %1774 = vmatpush1.msra.mxu0 %v1760
    %1775 = vmatprep.subr.mxu0 0.0
    %1776 = vmatpush1.msra.mxu0 %v1765
    %1777 = vmatprep.subr.mxu0 0.0
    %1778 = vmatpush1.msra.mxu0 0.0
    %1779 = vmatprep.subr.mxu0 0.0
    %1780 = vmatpush1.msra.mxu0 0.0
    %1781 = vmatprep.subr.mxu0 0.0
    %1782 = vmatpush1.msra.mxu0 0.0
    %1783 = vmatprep.subr.mxu0 0.0
    %1784 = vmatpush1.msra.mxu0 0.0
    %1785 = vmatprep.subr.mxu0 0.0
    %1786 = vmatpush1.msra.mxu0 0.0
    %1787 = vmatprep.subr.mxu0 0.0
    %1788 = vmatpush1.msra.mxu0 0.0
    %1789 = vmatprep.subr.mxu0 0.0
    %1790 = vmatpush1.msra.mxu0 0.0
    %1791 = vmatprep.subr.mxu0 0.0
    %1792 = vmatpush1.msra.mxu0 0.0
    %1793 = vmatprep.subr.mxu0 0.0
    %1794 = vmatpush1.msra.mxu0 0.0
    %1795 = vmatprep.subr.mxu0 0.0
    %1796 = vmatpush1.msra.mxu0 0.0
    %1797 = vmatprep.subr.mxu0 0.0
    %1798 = vmatpush1.msra.mxu0 0.0
    %1799 = vmatprep.subr.mxu0 0.0
    %1800 = vmatpush1.msra.mxu0 0.0
    %1801 = vmatprep.subr.mxu0 0.0
    %1802 = vmatpush1.msra.mxu0 0.0
    %1803 = vmatprep.subr.mxu0 0.0
    %1804 = vmatpush1.msra.mxu0 0.0
    %1805 = vmatprep.subr.mxu0 0.0
    %1806 = vmatpush1.msra.mxu0 0.0
    %1807 = vmatprep.subr.mxu0 0.0
    %1808 = vmatpush1.msra.mxu0 0.0
    %1809 = vmatprep.subr.mxu0 0.0
    %1810 = vmatpush1.msra.mxu0 0.0
    %1811 = vmatprep.subr.mxu0 0.0
    %1812 = vmatpush1.msra.mxu0 0.0
    %1813 = vmatprep.subr.mxu0 0.0
    %1814 = vmatpush1.msra.mxu0 0.0
    %1815 = vmatprep.subr.mxu0 0.0
    %1816 = vmatpush1.msra.mxu0 0.0
    %1817 = vmatprep.subr.mxu0 0.0
    %1818 = vmatpush1.msra.mxu0 0.0
    %1819 = vmatprep.subr.mxu0 0.0
    %1820 = vmatpush1.msra.mxu0 0.0
    %1821 = vmatprep.subr.mxu0 0.0
    %1822 = vmatpush1.msra.mxu0 0.0
    %1823 = vmatprep.subr.mxu0 0.0
    %1824 = vmatpush1.msra.mxu0 0.0
    %1825 = vmatprep.subr.mxu0 0.0
    %1826 = vmatpush1.msra.mxu0 0.0
    %1827 = vmatprep.subr.mxu0 0.0
    %1828 = vmatpush1.msra.mxu0 0.0
    %1829 = vmatprep.subr.mxu0 0.0
    %1830 = vmatpush1.msra.mxu0 0.0
    %1831 = vmatprep.subr.mxu0 0.0
    %1832 = vmatpush1.msra.mxu0 0.0
    %1833 = vmatprep.subr.mxu0 0.0
    %1834 = vmatpush1.msra.mxu0 0.0
    %1835 = vmatprep.subr.mxu0 0.0
    %1836 = vmatpush1.msra.mxu0 0.0
    %1837 = vmatprep.mubr.f32.mxu0 0.0
    %1838 = vmatmul.mubr.f32.gmra.mrb[0].mxu0 %v1771
    %v1839 = vpop.f32.mrb[0].mxu0
    %v1840 = vadd.f32 0.0, %v1839
    %v1841 = vpop.f32.mrb[0].mxu0
    %1842 = vdwg.mxu0
    %v1843 = vld [vmem:[#allocation2 + $0x4c0] sm:$0xff]
    %v1844 = vld [vmem:[#allocation2 + $0x4c8] sm:$0xff]
    %v1845 = vld [vmem:[#allocation2 + $0x4d0] sm:$0xff]
    %v1846 = vld [vmem:[#allocation2 + $0x4d8] sm:$0xff]
    %v1847 = vlaneseq
    %v1848 = vshrl.u32 %v1847, 7
    %v1849 = vsub.s32 0, %v1848
    %v1850 = vrot.slane %v47, %v1849
    %v1852 = vsel %vm1686, %v1840, 0
    %1854 = vmatprep.subr.mxu0 0.0
    %1855 = vmatpush1.msra.mxu0 %v1843
    %1856 = vmatprep.subr.mxu0 0.0
    %1857 = vmatpush1.msra.mxu0 %v1844
    %1858 = vmatprep.subr.mxu0 0.0
    %1859 = vmatpush1.msra.mxu0 %v1845
    %1860 = vmatprep.subr.mxu0 0.0
    %1861 = vmatpush1.msra.mxu0 %v1846
    %1862 = vmatprep.subr.mxu0 0.0
    %1863 = vmatpush1.msra.mxu0 0.0
    %1864 = vmatprep.subr.mxu0 0.0
    %1865 = vmatpush1.msra.mxu0 0.0
    %1866 = vmatprep.subr.mxu0 0.0
    %1867 = vmatpush1.msra.mxu0 0.0
    %1868 = vmatprep.subr.mxu0 0.0
    %1869 = vmatpush1.msra.mxu0 0.0
    %1870 = vmatprep.subr.mxu0 0.0
    %1871 = vmatpush1.msra.mxu0 0.0
    %1872 = vmatprep.subr.mxu0 0.0
    %1873 = vmatpush1.msra.mxu0 0.0
    %1874 = vmatprep.subr.mxu0 0.0
    %1875 = vmatpush1.msra.mxu0 0.0
    %1876 = vmatprep.subr.mxu0 0.0
    %1877 = vmatpush1.msra.mxu0 0.0
    %1878 = vmatprep.subr.mxu0 0.0
    %1879 = vmatpush1.msra.mxu0 0.0
    %1880 = vmatprep.subr.mxu0 0.0
    %1881 = vmatpush1.msra.mxu0 0.0
    %1882 = vmatprep.subr.mxu0 0.0
    %1883 = vmatpush1.msra.mxu0 0.0
    %1884 = vmatprep.subr.mxu0 0.0
    %1885 = vmatpush1.msra.mxu0 0.0
    %1886 = vmatprep.subr.mxu0 0.0
    %1887 = vmatpush1.msra.mxu0 0.0
    %1888 = vmatprep.subr.mxu0 0.0
    %1889 = vmatpush1.msra.mxu0 0.0
    %1890 = vmatprep.subr.mxu0 0.0
    %1891 = vmatpush1.msra.mxu0 0.0
    %1892 = vmatprep.subr.mxu0 0.0
    %1893 = vmatpush1.msra.mxu0 0.0
    %1894 = vmatprep.subr.mxu0 0.0
    %1895 = vmatpush1.msra.mxu0 0.0
    %1896 = vmatprep.subr.mxu0 0.0
    %1897 = vmatpush1.msra.mxu0 0.0
    %1898 = vmatprep.subr.mxu0 0.0
    %1899 = vmatpush1.msra.mxu0 0.0
    %1900 = vmatprep.subr.mxu0 0.0
    %1901 = vmatpush1.msra.mxu0 0.0
    %1902 = vmatprep.subr.mxu0 0.0
    %1903 = vmatpush1.msra.mxu0 0.0
    %1904 = vmatprep.subr.mxu0 0.0
    %1905 = vmatpush1.msra.mxu0 0.0
    %1906 = vmatprep.subr.mxu0 0.0
    %1907 = vmatpush1.msra.mxu0 0.0
    %1908 = vmatprep.subr.mxu0 0.0
    %1909 = vmatpush1.msra.mxu0 0.0
    %1910 = vmatprep.subr.mxu0 0.0
    %1911 = vmatpush1.msra.mxu0 0.0
    %1912 = vmatprep.subr.mxu0 0.0
    %1913 = vmatpush1.msra.mxu0 0.0
    %1914 = vmatprep.subr.mxu0 0.0
    %1915 = vmatpush1.msra.mxu0 0.0
    %1916 = vmatprep.subr.mxu0 0.0
    %1917 = vmatpush1.msra.mxu0 0.0
    %1918 = vmatprep.mubr.f32.mxu0 0.0
    %1919 = vmatmul.mubr.f32.gmra.mrb[0].mxu0 %v1852
    %v1920 = vpop.f32.mrb[0].mxu0
    %v1921 = vadd.f32 %v1850, %v1920
    %v1922 = vpop.f32.mrb[0].mxu0
    %1923 = vdwg.mxu0
    %v1924 = vmul.f32 %v1921, %v1921
    %v1925 = vmul.f32 %v1921, %v1924
    %v1926 = vmul.f32 %v1925, 0.044715
    %v1927 = vadd.f32 %v1921, %v1926
    %v1928 = vmul.f32 %v1927, 0.7978846
    %v1929 = vtanh.pop %v1928
    %v1930 = vadd.f32 %v1929, 1.0
    %v1931 = vmul.f32 %v1930, 0.5
    %v1932 = vmul.f32 %v1921, %v1931
    %v1933 = vlaneseq
    %v1934 = vshrl.u32 %v1933, 7
    %v1935 = vsub.s32 1, %v1934
    %v1936 = vrot.slane %v47, %v1935
    %v1937 = vmul.f32 %v1932, %v1936
    %vm1938 = vcmask 254976
    %v1939 = vsel %vm1938, %v1937, 0.0
    %1940 = vadd.xlane.f32.xlu0 %v1939
    %v1941 = vpop.xlane.xlu0 %1940
    %v1942 = vlaneseq
    %v1943 = vshrl.u32 %v1942, 7
    %v1944 = vsub.s32 2, %v1943
    %v1945 = vrot.slane %v47, %v1944
    %v1946 = vadd.f32 %v1941, %v1945
    %v1947 = vxor.u32 %v1946, 2147483648
    %v1948 = vmul.f32 %v1947, 1.442695
    %v1949 = vpow.pop %v1948
    %v1950 = vadd.f32 %v1949, 1.0
    %v1951 = vrcp.pop %v1950
    %v1952 = vmul.f32 1.0, %v1951
    %vm1953 = vcmask 1024
    %1954 = vst.msk [vmem:[%s4] sm:$0x3] %vm1953, %v1952
    // Predicated region
    $region26: #{forward.1} parent=1 // pred_check
      _
    $region27: #{forward.1} parent=1 // pred_check_branch
      %1956 = sbr.rel (0) target = $region29
    $region28: #{forward.1} parent=1 // pred_region
      _
    $region29: #{forward.1} parent=1 // pred_fallthru
      _
    // Predicated region
    $region30: #{forward.1} parent=1 // pred_check
      _
    $region31: #{forward.1} parent=1 // pred_check_branch
      %1958 = sbr.rel (0) target = $region33
    $region32: #{forward.1} parent=1 // pred_region
      _
    $region33: #{forward.1} parent=1 // pred_fallthru
      _
    %1959 = vsyncpa [#allocation3], 1
    %1960 = vsyncpa [#allocation5], 1

</llo_original>
